<compile_context>
chip_gen: v5e
topology: v5e:2x2
jax: 0.10.0
libtpu: 0.0.40
codegen_flags: <defaults>
</compile_context>

<pallas_src>
import functools
import math
import re

import jax
import jax.numpy as jnp
from jax import lax
from jax.experimental import pallas as pl
from jax.experimental.pallas import tpu as pltpu

_MIB = 1024 * 1024


def _layernorm(x, w, b, eps):
    u = jnp.mean(x, axis=-1, keepdims=True)
    s = jnp.mean(jnp.square(x - u), axis=-1, keepdims=True)
    return (x - u) * lax.rsqrt(s + eps) * w + b          # rsqrt -> EUP slot


def _gelu(x):
    c = math.sqrt(2.0 / math.pi)
    return 0.5 * x * (1.0 + jnp.tanh(c * (x + 0.044715 * (x * x * x))))


def coord_block_kernel(x_ref,
                       ln1w_ref, ln1b_ref,
                       attnw_ref, attnb_ref,
                       projw_ref, projb_ref,
                       ln2w_ref, ln2b_ref,
                       fcw_ref, fcb_ref,
                       fc2w_ref, fc2b_ref,
                       out_ref, present_ref,
                       acc_ref, h2_ref, ctx_ref,
                       *, n_head, eps, exp_dtype):
    c = pl.program_id(1)
    mm_dtype = attnw_ref.dtype          # bf16 operands -> MXU, f32 accumulation

    # ---- chunk 0: LN1 -> QKV -> attention -> c_proj -> residual -> LN2 ----
    @pl.when(c == 0)
    def _attention_part():
        x = x_ref[0].astype(jnp.float32)                # (T, C)
        T, C = x.shape
        Dh = C // n_head

        h1 = _layernorm(x, ln1w_ref[0], ln1b_ref[0], eps)
        qkv = jnp.dot(h1.astype(mm_dtype), attnw_ref[...],
                      preferred_element_type=jnp.float32) + attnb_ref[0]
        qkv_b = qkv.astype(mm_dtype)                    # single cast pass over (T, 3C)

        # Stage k/v head-major straight into the `present` output block (bf16).
        # This is the torch layout (2, B, H, T, Dh): present[0]=key^T, present[1]=value.
        # No f32 k/v temporaries stay live and the writeback DMA can start early.
        for h in range(n_head):
            lo = h * Dh
            present_ref[0, 0, h, :, :] = (
                qkv_b[:, C + lo:C + lo + Dh].astype(present_ref.dtype))
            present_ref[1, 0, h, :, :] = (
                qkv_b[:, 2 * C + lo:2 * C + lo + Dh].astype(present_ref.dtype))

        # Per-head attention.  Contexts are packed lane-wise into ctx_ref so that
        # c_proj is a single full-K (T, C) @ (C, C) matmul after the loop.
        for h in range(n_head):
            lo = h * Dh
            qh = qkv_b[:, lo:lo + Dh]
            kh = present_ref[0, 0, h, :, :].astype(mm_dtype)
            vh = present_ref[1, 0, h, :, :].astype(mm_dtype)
            # scores = q @ k^T (unscaled, unmasked: reference bias buffer is all-ones
            # and scale=False); contract last/last so no transpose is materialized.
            s = lax.dot_general(qh, kh, (((1,), (1,)), ((), ())),
                                preferred_element_type=jnp.float32)     # (T, T)
            sm = s - jnp.max(s, axis=-1, keepdims=True)
            e = jnp.exp(sm.astype(exp_dtype)).astype(jnp.float32)       # bf16 EUP on v6e+
            p = e * pl.reciprocal(jnp.sum(e, axis=-1, keepdims=True), approx=True)
            ctx = jnp.dot(p.astype(mm_dtype), vh,
                          preferred_element_type=jnp.float32)           # (T, Dh)
            ctx_ref[:, lo:lo + Dh] = ctx.astype(ctx_ref.dtype)

        a = jnp.dot(ctx_ref[...], projw_ref[...],
                    preferred_element_type=jnp.float32) + projb_ref[0]  # one c_proj

        x2 = x + a
        acc_ref[...] = x2
        h2_ref[...] = _layernorm(x2, ln2w_ref[0], ln2b_ref[0], eps)

    # ---- every chunk: one streamed slice of the MLP hidden dimension ----
    hf = _gelu(jnp.dot(h2_ref[...].astype(mm_dtype), fcw_ref[...],
                       preferred_element_type=jnp.float32) + fcb_ref[0])
    acc_ref[...] += jnp.dot(hf.astype(mm_dtype), fc2w_ref[...],
                            preferred_element_type=jnp.float32)

    # ---- last chunk: finalize residual output ----
    @pl.when(c == pl.num_programs(1) - 1)
    def _finalize():
        out_ref[0] = (acc_ref[...] + fc2b_ref[0]).astype(out_ref.dtype)


def _const_spec(shape, mode):
    """BlockSpec for a grid-invariant operand (same block every grid step)."""
    zeros = (0,) * len(shape)
    if mode is None:
        return pl.BlockSpec(shape, lambda b, c: zeros)
    return pl.BlockSpec(shape, lambda b, c: zeros, pipeline_mode=mode)


def _pick_hidden_block(h4, requested):
    """Largest multiple-of-128 divisor of 4C that is <= requested (never jumps to 4C)."""
    requested = min(int(requested), h4)
    if requested >= h4:
        return h4
    best = None
    smallest = None
    for cand in range(128, h4, 128):
        if h4 % cand == 0:
            if smallest is None:
                smallest = cand
            if cand <= requested:
                best = cand
    if best is not None:
        return best
    if smallest is not None:
        return smallest
    return h4  # 4C has no multiple-of-128 divisor; full-extent block is the only option


@functools.lru_cache(maxsize=None)
def _tpu_hw_info():
    """(generation, physical VMEM bytes or None) — queried once, cached."""
    vmem_cap = None
    gen = 0
    try:
        vmem_cap = int(pltpu.get_tpu_info().vmem_capacity_bytes)
    except Exception:
        vmem_cap = None
    try:
        kind = jax.devices()[0].device_kind
        m = re.search(r"(\d+)", kind)
        if m:
            gen = int(m.group(1))
    except Exception:
        gen = 0
    return gen, vmem_cap


@functools.lru_cache(maxsize=None)
def _single_buffer_weights_supported():
    """One-time capability check for pl.Buffered(1) (no per-call probe, never re-runs
    the real layer, no block_until_ready on the hot path)."""
    try:
        def _probe(x_ref, o_ref):
            o_ref[...] = x_ref[...] + 1.0

        fn = pl.pallas_call(
            _probe,
            out_shape=jax.ShapeDtypeStruct((8, 128), jnp.float32),
            grid=(2,),
            in_specs=[pl.BlockSpec((8, 128), lambda i: (0, 0),
                                   pipeline_mode=pl.Buffered(1))],
            out_specs=pl.BlockSpec((8, 128), lambda i: (0, 0)),
        )
        jax.jit(fn).lower(jax.ShapeDtypeStruct((8, 128), jnp.float32)).compile()
        return True
    except Exception:
        return False


def _coord_block_impl(x, params, n_head, eps, hb, use_single_buffer, exp_dtype,
                      vmem_limit_bytes):
    B, T, C = x.shape
    assert C % n_head == 0
    Dh = C // n_head
    H4 = 4 * C
    n_c = H4 // hb
    mm_dtype = params["attn_w"].dtype

    # Grid-invariant weights: single VMEM buffer (no pointless double-buffering).
    mode = pl.Buffered(1) if use_single_buffer else None

    row = pl.BlockSpec((1, T, C), lambda b, c: (b, 0, 0))
    present_spec = pl.BlockSpec((2, 1, n_head, T, Dh), lambda b, c: (0, b, 0, 0, 0))

    in_specs = [
        row,                                                            # x
        _const_spec((1, C), mode), _const_spec((1, C), mode),           # ln_1
        _const_spec((C, 3 * C), mode), _const_spec((1, 3 * C), mode),   # attn.c_attn
        _const_spec((C, C), mode), _const_spec((1, C), mode),           # attn.c_proj
        _const_spec((1, C), mode), _const_spec((1, C), mode),           # ln_2
        pl.BlockSpec((C, hb), lambda b, c: (0, c)),                     # mlp.c_fc w (streamed)
        pl.BlockSpec((1, hb), lambda b, c: (0, c)),                     # mlp.c_fc b (streamed)
        pl.BlockSpec((hb, C), lambda b, c: (c, 0)),                     # mlp.c_proj w (streamed)
        _const_spec((1, C), mode),                                      # mlp.c_proj b
    ]

    out_shapes = (
        jax.ShapeDtypeStruct((B, T, C), x.dtype),                 # block output
        jax.ShapeDtypeStruct((2, B, n_head, T, Dh), jnp.bfloat16),  # present (torch layout)
    )

    kernel = functools.partial(coord_block_kernel, n_head=n_head, eps=eps,
                               exp_dtype=exp_dtype)

    w_itemsize = jnp.dtype(mm_dtype).itemsize
    cost = pl.CostEstimate(
        flops=int(24 * B * T * C * C + 4 * B * T * T * C),
        transcendentals=int(B * (n_head * T * T + 4 * T * C)),
        bytes_accessed=int(12 * C * C * w_itemsize
                           + 2 * B * T * C * jnp.dtype(x.dtype).itemsize
                           + 2 * B * T * C * 2),
    )

    out, present = pl.pallas_call(
        kernel,
        out_shape=out_shapes,
        grid=(B, n_c),
        in_specs=in_specs,
        out_specs=(row, present_spec),
        scratch_shapes=[pltpu.VMEM((T, C), jnp.float32),   # residual / output accumulator
                        pltpu.VMEM((T, C), jnp.float32),   # LN2 activations
                        pltpu.VMEM((T, C), mm_dtype)],     # packed per-head contexts
        compiler_params=pltpu.CompilerParams(
            dimension_semantics=("parallel", "arbitrary"),
            vmem_limit_bytes=int(vmem_limit_bytes)),
        cost_estimate=cost,
    )(x,
      params["ln1_w"], params["ln1_b"],
      params["attn_w"], params["attn_b"],
      params["proj_w"], params["proj_b"],
      params["ln2_w"], params["ln2_b"],
      params["fc_w"], params["fc_b"],
      params["fc2_w"], params["fc2_b"])

    return out, present


def coord_block(x, params, n_head, eps=1e-5, hidden_block=None):
    """Returns (out, present) exactly like CoordBlock.forward (layer_past=None).

    present is emitted directly in the torch layout (2, B, n_head, T, Dh), bf16."""
    B, T, C = x.shape
    H4 = 4 * C
    gen, vmem_cap = _tpu_hw_info()

    # Generation-aware VMEM budget + MLP hidden tile.
    if vmem_cap is not None and vmem_cap >= 100 * _MIB:      # v5e / v6e class (128 MiB)
        vmem_limit = 100 * _MIB
        default_hb = 2048
    elif vmem_cap is None:                                   # unknown: conservative (v7x)
        vmem_limit = 48 * _MIB
        default_hb = 512
    else:                                                    # v7x class (64 MiB) or smaller
        vmem_limit = min(48 * _MIB, (vmem_cap * 3) // 4)
        default_hb = 512
    hb = _pick_hidden_block(H4, hidden_block if hidden_block is not None else default_hb)

    # bf16 softmax exp only on chips with a bf16 EUP (v6e / v7x); f32 otherwise.
    exp_dtype = jnp.bfloat16 if gen >= 6 else jnp.float32

    return _coord_block_impl(x, params, n_head, eps, hb,
                             use_single_buffer=_single_buffer_weights_supported(),
                             exp_dtype=exp_dtype,
                             vmem_limit_bytes=vmem_limit)


def ref_forward(x, p, n_head, eps=1e-5):
    """Pure-JAX f32 reference of CoordBlock.forward for validation."""
    B, T, C = x.shape
    Dh = C // n_head
    f32 = jnp.float32

    def ln(t, w, b):
        u = t.mean(-1, keepdims=True)
        s = ((t - u) ** 2).mean(-1, keepdims=True)
        return (t - u) / jnp.sqrt(s + eps) * w + b

    h1 = ln(x, p["ln1_w"][0], p["ln1_b"][0])
    qkv = h1 @ p["attn_w"].astype(f32) + p["attn_b"][0]
    q, k, v = jnp.split(qkv, 3, axis=-1)
    qh = q.reshape(B, T, n_head, Dh).transpose(0, 2, 1, 3)
    khT = k.reshape(B, T, n_head, Dh).transpose(0, 2, 1, 3)   # == key.transpose(-2,-1)
    vh = v.reshape(B, T, n_head, Dh).transpose(0, 2, 1, 3)
    w = jnp.einsum("bhtd,bhsd->bhts", qh, khT)                # unscaled, unmasked
    w = jax.nn.softmax(w, axis=-1)
    a = jnp.einsum("bhts,bhsd->bhtd", w, vh)
    a = a.transpose(0, 2, 1, 3).reshape(B, T, C)
    a = a @ p["proj_w"].astype(f32) + p["proj_b"][0]
    x2 = x + a
    h2 = ln(x2, p["ln2_w"][0], p["ln2_b"][0])
    hf = _gelu(h2 @ p["fc_w"].astype(f32) + p["fc_b"][0])
    m = hf @ p["fc2_w"].astype(f32) + p["fc2_b"][0]
    present = jnp.stack([khT, vh], axis=0)                    # (2, B, H, T, Dh)
    return x2 + m, present


def init_params(key, C, matmul_dtype=jnp.bfloat16):
    ks = jax.random.split(key, 4)
    std = 0.02
    f32 = jnp.float32
    return {
        "ln1_w": jnp.ones((1, C), f32),
        "ln1_b": jnp.zeros((1, C), f32),
        "attn_w": (std * jax.random.normal(ks[0], (C, 3 * C), f32)).astype(matmul_dtype),
        "attn_b": jnp.zeros((1, 3 * C), f32),
        "proj_w": (std * jax.random.normal(ks[1], (C, C), f32)).astype(matmul_dtype),
        "proj_b": jnp.zeros((1, C), f32),
        "ln2_w": jnp.ones((1, C), f32),
        "ln2_b": jnp.zeros((1, C), f32),
        "fc_w": (std * jax.random.normal(ks[2], (C, 4 * C), f32)).astype(matmul_dtype),
        "fc_b": jnp.zeros((1, 4 * C), f32),
        "fc2_w": (std * jax.random.normal(ks[3], (4 * C, C), f32)).astype(matmul_dtype),
        "fc2_b": jnp.zeros((1, C), f32),
    }


if __name__ == "__main__":
    B, T, C, H = 2, 8, 64, 4          # batch, n_ctx, n_embd, n_head
    eps = 1e-5                        # config.layer_norm_epsilon (GPT-2 value)

    key = jax.random.PRNGKey(0)
    kx, kp = jax.random.split(key)
    x = jax.random.normal(kx, (B, T, C), jnp.float32)
    params = init_params(kp, C)

    # hidden_block=128 exercises the streamed-MLP path (4C=256 -> 2 hidden chunks).
    out, present = coord_block(x, params, n_head=H, eps=eps, hidden_block=128)
    out = jax.block_until_ready(out)
    present = jax.block_until_ready(present)

    assert out.shape == (B, T, C)
    assert present.shape == (2, B, H, T, C // H)

    ref_out, ref_present = ref_forward(x, params, n_head=H, eps=eps)
    assert jnp.allclose(out, ref_out, atol=2e-2, rtol=2e-2), \
        "output mismatch vs JAX reference"
    assert jnp.allclose(present.astype(jnp.float32), ref_present, atol=2e-2, rtol=2e-2), \
        "present mismatch vs JAX reference"

    print("KERNEL_OK")
</pallas_src>

<mosaic_0001>
module attributes {stable_mosaic.version = 11 : i64} {
  func.func @coord_block_kernel(%arg0: i32, %arg1: i32, %arg2: memref<1x8x64xf32, #tpu.memory_space<vmem>>, %arg3: memref<1x64xf32, #tpu.memory_space<vmem>>, %arg4: memref<1x64xf32, #tpu.memory_space<vmem>>, %arg5: memref<64x192xbf16, #tpu.memory_space<vmem>>, %arg6: memref<1x192xf32, #tpu.memory_space<vmem>>, %arg7: memref<64x64xbf16, #tpu.memory_space<vmem>>, %arg8: memref<1x64xf32, #tpu.memory_space<vmem>>, %arg9: memref<1x64xf32, #tpu.memory_space<vmem>>, %arg10: memref<1x64xf32, #tpu.memory_space<vmem>>, %arg11: memref<64x128xbf16, #tpu.memory_space<vmem>>, %arg12: memref<1x128xf32, #tpu.memory_space<vmem>>, %arg13: memref<128x64xbf16, #tpu.memory_space<vmem>>, %arg14: memref<1x64xf32, #tpu.memory_space<vmem>>, %arg15: memref<1x8x64xf32, #tpu.memory_space<vmem>>, %arg16: memref<2x1x4x8x16xbf16, #tpu.memory_space<vmem>>, %arg17: memref<8x64xf32, #tpu.memory_space<vmem>>, %arg18: memref<8x64xf32, #tpu.memory_space<vmem>>, %arg19: memref<8x64xbf16, #tpu.memory_space<vmem>>) attributes {dimension_semantics = [#tpu.dimension_semantics<parallel>, #tpu.dimension_semantics<arbitrary>], iteration_bounds = array<i64: 2, 2>, scalar_prefetch = 0 : i64, scratch_operands = 3 : i64, tpu.core_type = #tpu.core_type<tc>, window_params = [{transform_indices = @transform_0, window_bounds = array<i64: 1, 8, 64>}, {pipeline_mode = #tpu.pipeline_mode<synchronous>, transform_indices = @transform_1, window_bounds = array<i64: 1, 64>}, {pipeline_mode = #tpu.pipeline_mode<synchronous>, transform_indices = @transform_2, window_bounds = array<i64: 1, 64>}, {pipeline_mode = #tpu.pipeline_mode<synchronous>, transform_indices = @transform_3, window_bounds = array<i64: 64, 192>}, {pipeline_mode = #tpu.pipeline_mode<synchronous>, transform_indices = @transform_4, window_bounds = array<i64: 1, 192>}, {pipeline_mode = #tpu.pipeline_mode<synchronous>, transform_indices = @transform_5, window_bounds = array<i64: 64, 64>}, {pipeline_mode = #tpu.pipeline_mode<synchronous>, transform_indices = @transform_6, window_bounds = array<i64: 1, 64>}, {pipeline_mode = #tpu.pipeline_mode<synchronous>, transform_indices = @transform_7, window_bounds = array<i64: 1, 64>}, {pipeline_mode = #tpu.pipeline_mode<synchronous>, transform_indices = @transform_8, window_bounds = array<i64: 1, 64>}, {transform_indices = @transform_9, window_bounds = array<i64: 64, 128>}, {transform_indices = @transform_10, window_bounds = array<i64: 1, 128>}, {transform_indices = @transform_11, window_bounds = array<i64: 128, 64>}, {pipeline_mode = #tpu.pipeline_mode<synchronous>, transform_indices = @transform_12, window_bounds = array<i64: 1, 64>}, {transform_indices = @transform_13, window_bounds = array<i64: 1, 8, 64>}, {transform_indices = @transform_14, window_bounds = array<i64: 2, 1, 4, 8, 16>}]} {
    %c0_i32 = arith.constant 0 : i32
    %0 = arith.cmpi eq, %arg1, %c0_i32 : i32
    %1 = arith.extui %0 : i1 to i32
    %c0_i32_0 = arith.constant 0 : i32
    %2 = arith.cmpi ne, %1, %c0_i32_0 : i32
    scf.if %2 {
      %c0_18 = arith.constant 0 : index
      %c0_19 = arith.constant 0 : index
      %c0_20 = arith.constant 0 : index
      %34 = vector.load %arg2[%c0_18, %c0_19, %c0_20] : memref<1x8x64xf32, #tpu.memory_space<vmem>>, vector<1x8x64xf32>
      %35 = vector.shape_cast %34 : vector<1x8x64xf32> to vector<8x64xf32>
      %c0_21 = arith.constant 0 : index
      %c0_22 = arith.constant 0 : index
      %36 = vector.load %arg3[%c0_21, %c0_22] : memref<1x64xf32, #tpu.memory_space<vmem>>, vector<1x64xf32>
      %37 = vector.shape_cast %36 : vector<1x64xf32> to vector<64xf32>
      %c0_23 = arith.constant 0 : index
      %c0_24 = arith.constant 0 : index
      %38 = vector.load %arg4[%c0_23, %c0_24] : memref<1x64xf32, #tpu.memory_space<vmem>>, vector<1x64xf32>
      %39 = vector.shape_cast %38 : vector<1x64xf32> to vector<64xf32>
      %cst_25 = arith.constant dense<0.000000e+00> : vector<8xf32>
      %40 = vector.multi_reduction <add>, %35, %cst_25 [1] : vector<8x64xf32> to vector<8xf32>
      %41 = vector.shape_cast %40 : vector<8xf32> to vector<8x1xf32>
      %cst_26 = arith.constant 6.400000e+01 : f32
      %42 = vector.broadcast %cst_26 : f32 to vector<8x1xf32>
      %43 = arith.divf %41, %42 : vector<8x1xf32>
      %44 = vector.broadcast %43 : vector<8x1xf32> to vector<8x64xf32>
      %45 = arith.subf %35, %44 : vector<8x64xf32>
      %46 = arith.mulf %45, %45 : vector<8x64xf32>
      %cst_27 = arith.constant dense<0.000000e+00> : vector<8xf32>
      %47 = vector.multi_reduction <add>, %46, %cst_27 [1] : vector<8x64xf32> to vector<8xf32>
      %48 = vector.shape_cast %47 : vector<8xf32> to vector<8x1xf32>
      %cst_28 = arith.constant 6.400000e+01 : f32
      %49 = vector.broadcast %cst_28 : f32 to vector<8x1xf32>
      %50 = arith.divf %48, %49 : vector<8x1xf32>
      %51 = vector.broadcast %43 : vector<8x1xf32> to vector<8x64xf32>
      %52 = arith.subf %35, %51 : vector<8x64xf32>
      %cst_29 = arith.constant 9.99999974E-6 : f32
      %53 = vector.broadcast %cst_29 : f32 to vector<8x1xf32>
      %54 = arith.addf %50, %53 : vector<8x1xf32>
      %55 = math.rsqrt %54 : vector<8x1xf32>
      %56 = vector.broadcast %55 : vector<8x1xf32> to vector<8x64xf32>
      %57 = arith.mulf %52, %56 : vector<8x64xf32>
      %58 = vector.shape_cast %37 : vector<64xf32> to vector<1x64xf32>
      %59 = vector.broadcast %58 : vector<1x64xf32> to vector<8x64xf32>
      %60 = arith.mulf %57, %59 : vector<8x64xf32>
      %61 = vector.shape_cast %39 : vector<64xf32> to vector<1x64xf32>
      %62 = vector.broadcast %61 : vector<1x64xf32> to vector<8x64xf32>
      %63 = arith.addf %60, %62 : vector<8x64xf32>
      %64 = arith.truncf %63 : vector<8x64xf32> to vector<8x64xbf16>
      %c0_30 = arith.constant 0 : index
      %c0_31 = arith.constant 0 : index
      %65 = vector.load %arg5[%c0_30, %c0_31] : memref<64x192xbf16, #tpu.memory_space<vmem>>, vector<64x192xbf16>
      %cst_32 = arith.constant dense<0.000000e+00> : vector<8x192xf32>
      %66 = tpu.matmul %64, %65, %cst_32 {dimension_numbers = #tpu.dot_dimension_numbers<[1], [0], [0], [1], [0, 0, 1, 1], [], []>} : vector<8x64xbf16>, vector<64x192xbf16>, vector<8x192xf32> -> vector<8x192xf32>
      %c0_33 = arith.constant 0 : index
      %c0_34 = arith.constant 0 : index
      %67 = vector.load %arg6[%c0_33, %c0_34] : memref<1x192xf32, #tpu.memory_space<vmem>>, vector<1x192xf32>
      %68 = vector.shape_cast %67 : vector<1x192xf32> to vector<192xf32>
      %69 = vector.shape_cast %68 : vector<192xf32> to vector<1x192xf32>
      %70 = vector.broadcast %69 : vector<1x192xf32> to vector<8x192xf32>
      %71 = arith.addf %66, %70 : vector<8x192xf32>
      %72 = arith.truncf %71 : vector<8x192xf32> to vector<8x192xbf16>
      %73 = vector.extract_strided_slice %72 {offsets = [0, 64], sizes = [8, 16], strides = [1, 1]} : vector<8x192xbf16> to vector<8x16xbf16>
      %c0_35 = arith.constant 0 : index
      %c0_36 = arith.constant 0 : index
      %c0_37 = arith.constant 0 : index
      %c0_38 = arith.constant 0 : index
      %c0_39 = arith.constant 0 : index
      %74 = vector.load %arg16[%c0_35, %c0_36, %c0_37, %c0_38, %c0_39] : memref<2x1x4x8x16xbf16, #tpu.memory_space<vmem>>, vector<1x1x1x8x16xbf16>
      %75 = vector.shape_cast %74 : vector<1x1x1x8x16xbf16> to vector<8x16xbf16>
      %76 = vector.shape_cast %73 : vector<8x16xbf16> to vector<1x1x1x8x16xbf16>
      tpu.vector_store %arg16[%c0_35, %c0_36, %c0_37, %c0_38, %c0_39], %76 {strides = array<i32>} : memref<2x1x4x8x16xbf16, #tpu.memory_space<vmem>>, vector<1x1x1x8x16xbf16>,
      %77 = vector.extract_strided_slice %72 {offsets = [0, 128], sizes = [8, 16], strides = [1, 1]} : vector<8x192xbf16> to vector<8x16xbf16>
      %c1 = arith.constant 1 : index
      %c0_40 = arith.constant 0 : index
      %c0_41 = arith.constant 0 : index
      %c0_42 = arith.constant 0 : index
      %c0_43 = arith.constant 0 : index
      %78 = vector.load %arg16[%c1, %c0_40, %c0_41, %c0_42, %c0_43] : memref<2x1x4x8x16xbf16, #tpu.memory_space<vmem>>, vector<1x1x1x8x16xbf16>
      %79 = vector.shape_cast %78 : vector<1x1x1x8x16xbf16> to vector<8x16xbf16>
      %80 = vector.shape_cast %77 : vector<8x16xbf16> to vector<1x1x1x8x16xbf16>
      tpu.vector_store %arg16[%c1, %c0_40, %c0_41, %c0_42, %c0_43], %80 {strides = array<i32>} : memref<2x1x4x8x16xbf16, #tpu.memory_space<vmem>>, vector<1x1x1x8x16xbf16>,
      %81 = vector.extract_strided_slice %72 {offsets = [0, 80], sizes = [8, 16], strides = [1, 1]} : vector<8x192xbf16> to vector<8x16xbf16>
      %c0_44 = arith.constant 0 : index
      %c0_45 = arith.constant 0 : index
      %c1_46 = arith.constant 1 : index
      %c0_47 = arith.constant 0 : index
      %c0_48 = arith.constant 0 : index
      %82 = vector.load %arg16[%c0_44, %c0_45, %c1_46, %c0_47, %c0_48] : memref<2x1x4x8x16xbf16, #tpu.memory_space<vmem>>, vector<1x1x1x8x16xbf16>
      %83 = vector.shape_cast %82 : vector<1x1x1x8x16xbf16> to vector<8x16xbf16>
      %84 = vector.shape_cast %81 : vector<8x16xbf16> to vector<1x1x1x8x16xbf16>
      tpu.vector_store %arg16[%c0_44, %c0_45, %c1_46, %c0_47, %c0_48], %84 {strides = array<i32>} : memref<2x1x4x8x16xbf16, #tpu.memory_space<vmem>>, vector<1x1x1x8x16xbf16>,
      %85 = vector.extract_strided_slice %72 {offsets = [0, 144], sizes = [8, 16], strides = [1, 1]} : vector<8x192xbf16> to vector<8x16xbf16>
      %c1_49 = arith.constant 1 : index
      %c0_50 = arith.constant 0 : index
      %c1_51 = arith.constant 1 : index
      %c0_52 = arith.constant 0 : index
      %c0_53 = arith.constant 0 : index
      %86 = vector.load %arg16[%c1_49, %c0_50, %c1_51, %c0_52, %c0_53] : memref<2x1x4x8x16xbf16, #tpu.memory_space<vmem>>, vector<1x1x1x8x16xbf16>
      %87 = vector.shape_cast %86 : vector<1x1x1x8x16xbf16> to vector<8x16xbf16>
      %88 = vector.shape_cast %85 : vector<8x16xbf16> to vector<1x1x1x8x16xbf16>
      tpu.vector_store %arg16[%c1_49, %c0_50, %c1_51, %c0_52, %c0_53], %88 {strides = array<i32>} : memref<2x1x4x8x16xbf16, #tpu.memory_space<vmem>>, vector<1x1x1x8x16xbf16>,
      %89 = vector.extract_strided_slice %72 {offsets = [0, 96], sizes = [8, 16], strides = [1, 1]} : vector<8x192xbf16> to vector<8x16xbf16>
      %c0_54 = arith.constant 0 : index
      %c0_55 = arith.constant 0 : index
      %c2 = arith.constant 2 : index
      %c0_56 = arith.constant 0 : index
      %c0_57 = arith.constant 0 : index
      %90 = vector.load %arg16[%c0_54, %c0_55, %c2, %c0_56, %c0_57] : memref<2x1x4x8x16xbf16, #tpu.memory_space<vmem>>, vector<1x1x1x8x16xbf16>
      %91 = vector.shape_cast %90 : vector<1x1x1x8x16xbf16> to vector<8x16xbf16>
      %92 = vector.shape_cast %89 : vector<8x16xbf16> to vector<1x1x1x8x16xbf16>
      tpu.vector_store %arg16[%c0_54, %c0_55, %c2, %c0_56, %c0_57], %92 {strides = array<i32>} : memref<2x1x4x8x16xbf16, #tpu.memory_space<vmem>>, vector<1x1x1x8x16xbf16>,
      %93 = vector.extract_strided_slice %72 {offsets = [0, 160], sizes = [8, 16], strides = [1, 1]} : vector<8x192xbf16> to vector<8x16xbf16>
      %c1_58 = arith.constant 1 : index
      %c0_59 = arith.constant 0 : index
      %c2_60 = arith.constant 2 : index
      %c0_61 = arith.constant 0 : index
      %c0_62 = arith.constant 0 : index
      %94 = vector.load %arg16[%c1_58, %c0_59, %c2_60, %c0_61, %c0_62] : memref<2x1x4x8x16xbf16, #tpu.memory_space<vmem>>, vector<1x1x1x8x16xbf16>
      %95 = vector.shape_cast %94 : vector<1x1x1x8x16xbf16> to vector<8x16xbf16>
      %96 = vector.shape_cast %93 : vector<8x16xbf16> to vector<1x1x1x8x16xbf16>
      tpu.vector_store %arg16[%c1_58, %c0_59, %c2_60, %c0_61, %c0_62], %96 {strides = array<i32>} : memref<2x1x4x8x16xbf16, #tpu.memory_space<vmem>>, vector<1x1x1x8x16xbf16>,
      %97 = vector.extract_strided_slice %72 {offsets = [0, 112], sizes = [8, 16], strides = [1, 1]} : vector<8x192xbf16> to vector<8x16xbf16>
      %c0_63 = arith.constant 0 : index
      %c0_64 = arith.constant 0 : index
      %c3 = arith.constant 3 : index
      %c0_65 = arith.constant 0 : index
      %c0_66 = arith.constant 0 : index
      %98 = vector.load %arg16[%c0_63, %c0_64, %c3, %c0_65, %c0_66] : memref<2x1x4x8x16xbf16, #tpu.memory_space<vmem>>, vector<1x1x1x8x16xbf16>
      %99 = vector.shape_cast %98 : vector<1x1x1x8x16xbf16> to vector<8x16xbf16>
      %100 = vector.shape_cast %97 : vector<8x16xbf16> to vector<1x1x1x8x16xbf16>
      tpu.vector_store %arg16[%c0_63, %c0_64, %c3, %c0_65, %c0_66], %100 {strides = array<i32>} : memref<2x1x4x8x16xbf16, #tpu.memory_space<vmem>>, vector<1x1x1x8x16xbf16>,
      %101 = vector.extract_strided_slice %72 {offsets = [0, 176], sizes = [8, 16], strides = [1, 1]} : vector<8x192xbf16> to vector<8x16xbf16>
      %c1_67 = arith.constant 1 : index
      %c0_68 = arith.constant 0 : index
      %c3_69 = arith.constant 3 : index
      %c0_70 = arith.constant 0 : index
      %c0_71 = arith.constant 0 : index
      %102 = vector.load %arg16[%c1_67, %c0_68, %c3_69, %c0_70, %c0_71] : memref<2x1x4x8x16xbf16, #tpu.memory_space<vmem>>, vector<1x1x1x8x16xbf16>
      %103 = vector.shape_cast %102 : vector<1x1x1x8x16xbf16> to vector<8x16xbf16>
      %104 = vector.shape_cast %101 : vector<8x16xbf16> to vector<1x1x1x8x16xbf16>
      tpu.vector_store %arg16[%c1_67, %c0_68, %c3_69, %c0_70, %c0_71], %104 {strides = array<i32>} : memref<2x1x4x8x16xbf16, #tpu.memory_space<vmem>>, vector<1x1x1x8x16xbf16>,
      %105 = vector.extract_strided_slice %72 {offsets = [0, 0], sizes = [8, 16], strides = [1, 1]} : vector<8x192xbf16> to vector<8x16xbf16>
      %c0_72 = arith.constant 0 : index
      %c0_73 = arith.constant 0 : index
      %c0_74 = arith.constant 0 : index
      %c0_75 = arith.constant 0 : index
      %c0_76 = arith.constant 0 : index
      %106 = vector.load %arg16[%c0_72, %c0_73, %c0_74, %c0_75, %c0_76] : memref<2x1x4x8x16xbf16, #tpu.memory_space<vmem>>, vector<1x1x1x8x16xbf16>
      %107 = vector.shape_cast %106 : vector<1x1x1x8x16xbf16> to vector<8x16xbf16>
      %c1_77 = arith.constant 1 : index
      %c0_78 = arith.constant 0 : index
      %c0_79 = arith.constant 0 : index
      %c0_80 = arith.constant 0 : index
      %c0_81 = arith.constant 0 : index
      %108 = vector.load %arg16[%c1_77, %c0_78, %c0_79, %c0_80, %c0_81] : memref<2x1x4x8x16xbf16, #tpu.memory_space<vmem>>, vector<1x1x1x8x16xbf16>
      %109 = vector.shape_cast %108 : vector<1x1x1x8x16xbf16> to vector<8x16xbf16>
      %cst_82 = arith.constant dense<0.000000e+00> : vector<8x8xf32>
      %110 = tpu.matmul %105, %107, %cst_82 {dimension_numbers = #tpu.dot_dimension_numbers<[1], [1], [0], [0], [0, 0, 1, 0], [], []>} : vector<8x16xbf16>, vector<8x16xbf16>, vector<8x8xf32> -> vector<8x8xf32>
      %cst_83 = arith.constant dense<0xFF800000> : vector<8xf32>
      %111 = vector.multi_reduction <maximumf>, %110, %cst_83 [1] : vector<8x8xf32> to vector<8xf32>
      %112 = vector.shape_cast %111 : vector<8xf32> to vector<8x1xf32>
      %113 = vector.broadcast %112 : vector<8x1xf32> to vector<8x8xf32>
      %114 = arith.subf %110, %113 : vector<8x8xf32>
      %115 = math.exp %114 : vector<8x8xf32>
      %cst_84 = arith.constant dense<0.000000e+00> : vector<8xf32>
      %116 = vector.multi_reduction <add>, %115, %cst_84 [1] : vector<8x8xf32> to vector<8xf32>
      %117 = vector.shape_cast %116 : vector<8xf32> to vector<8x1xf32>
      %118 = tpu.reciprocal %117 {approx = true} : vector<8x1xf32> -> vector<8x1xf32>
      %119 = vector.broadcast %118 : vector<8x1xf32> to vector<8x8xf32>
      %120 = arith.mulf %115, %119 : vector<8x8xf32>
      %121 = arith.truncf %120 : vector<8x8xf32> to vector<8x8xbf16>
      %cst_85 = arith.constant dense<0.000000e+00> : vector<8x16xf32>
      %122 = tpu.matmul %121, %109, %cst_85 {dimension_numbers = #tpu.dot_dimension_numbers<[1], [0], [0], [1], [0, 0, 1, 1], [], []>} : vector<8x8xbf16>, vector<8x16xbf16>, vector<8x16xf32> -> vector<8x16xf32>
      %123 = arith.truncf %122 : vector<8x16xf32> to vector<8x16xbf16>
      %c0_86 = arith.constant 0 : index
      %c0_87 = arith.constant 0 : index
      %124 = vector.load %arg19[%c0_86, %c0_87] : memref<8x64xbf16, #tpu.memory_space<vmem>>, vector<8x16xbf16>
      tpu.vector_store %arg19[%c0_86, %c0_87], %123 {strides = array<i32>} : memref<8x64xbf16, #tpu.memory_space<vmem>>, vector<8x16xbf16>,
      %125 = vector.extract_strided_slice %72 {offsets = [0, 16], sizes = [8, 16], strides = [1, 1]} : vector<8x192xbf16> to vector<8x16xbf16>
      %c0_88 = arith.constant 0 : index
      %c0_89 = arith.constant 0 : index
      %c1_90 = arith.constant 1 : index
      %c0_91 = arith.constant 0 : index
      %c0_92 = arith.constant 0 : index
      %126 = vector.load %arg16[%c0_88, %c0_89, %c1_90, %c0_91, %c0_92] : memref<2x1x4x8x16xbf16, #tpu.memory_space<vmem>>, vector<1x1x1x8x16xbf16>
      %127 = vector.shape_cast %126 : vector<1x1x1x8x16xbf16> to vector<8x16xbf16>
      %c1_93 = arith.constant 1 : index
      %c0_94 = arith.constant 0 : index
      %c1_95 = arith.constant 1 : index
      %c0_96 = arith.constant 0 : index
      %c0_97 = arith.constant 0 : index
      %128 = vector.load %arg16[%c1_93, %c0_94, %c1_95, %c0_96, %c0_97] : memref<2x1x4x8x16xbf16, #tpu.memory_space<vmem>>, vector<1x1x1x8x16xbf16>
      %129 = vector.shape_cast %128 : vector<1x1x1x8x16xbf16> to vector<8x16xbf16>
      %cst_98 = arith.constant dense<0.000000e+00> : vector<8x8xf32>
      %130 = tpu.matmul %125, %127, %cst_98 {dimension_numbers = #tpu.dot_dimension_numbers<[1], [1], [0], [0], [0, 0, 1, 0], [], []>} : vector<8x16xbf16>, vector<8x16xbf16>, vector<8x8xf32> -> vector<8x8xf32>
      %cst_99 = arith.constant dense<0xFF800000> : vector<8xf32>
      %131 = vector.multi_reduction <maximumf>, %130, %cst_99 [1] : vector<8x8xf32> to vector<8xf32>
      %132 = vector.shape_cast %131 : vector<8xf32> to vector<8x1xf32>
      %133 = vector.broadcast %132 : vector<8x1xf32> to vector<8x8xf32>
      %134 = arith.subf %130, %133 : vector<8x8xf32>
      %135 = math.exp %134 : vector<8x8xf32>
      %cst_100 = arith.constant dense<0.000000e+00> : vector<8xf32>
      %136 = vector.multi_reduction <add>, %135, %cst_100 [1] : vector<8x8xf32> to vector<8xf32>
      %137 = vector.shape_cast %136 : vector<8xf32> to vector<8x1xf32>
      %138 = tpu.reciprocal %137 {approx = true} : vector<8x1xf32> -> vector<8x1xf32>
      %139 = vector.broadcast %138 : vector<8x1xf32> to vector<8x8xf32>
      %140 = arith.mulf %135, %139 : vector<8x8xf32>
      %141 = arith.truncf %140 : vector<8x8xf32> to vector<8x8xbf16>
      %cst_101 = arith.constant dense<0.000000e+00> : vector<8x16xf32>
      %142 = tpu.matmul %141, %129, %cst_101 {dimension_numbers = #tpu.dot_dimension_numbers<[1], [0], [0], [1], [0, 0, 1, 1], [], []>} : vector<8x8xbf16>, vector<8x16xbf16>, vector<8x16xf32> -> vector<8x16xf32>
      %143 = arith.truncf %142 : vector<8x16xf32> to vector<8x16xbf16>
      %c0_102 = arith.constant 0 : index
      %c16 = arith.constant 16 : index
      %144 = vector.load %arg19[%c0_102, %c16] : memref<8x64xbf16, #tpu.memory_space<vmem>>, vector<8x16xbf16>
      tpu.vector_store %arg19[%c0_102, %c16], %143 {strides = array<i32>} : memref<8x64xbf16, #tpu.memory_space<vmem>>, vector<8x16xbf16>,
      %145 = vector.extract_strided_slice %72 {offsets = [0, 32], sizes = [8, 16], strides = [1, 1]} : vector<8x192xbf16> to vector<8x16xbf16>
      %c0_103 = arith.constant 0 : index
      %c0_104 = arith.constant 0 : index
      %c2_105 = arith.constant 2 : index
      %c0_106 = arith.constant 0 : index
      %c0_107 = arith.constant 0 : index
      %146 = vector.load %arg16[%c0_103, %c0_104, %c2_105, %c0_106, %c0_107] : memref<2x1x4x8x16xbf16, #tpu.memory_space<vmem>>, vector<1x1x1x8x16xbf16>
      %147 = vector.shape_cast %146 : vector<1x1x1x8x16xbf16> to vector<8x16xbf16>
      %c1_108 = arith.constant 1 : index
      %c0_109 = arith.constant 0 : index
      %c2_110 = arith.constant 2 : index
      %c0_111 = arith.constant 0 : index
      %c0_112 = arith.constant 0 : index
      %148 = vector.load %arg16[%c1_108, %c0_109, %c2_110, %c0_111, %c0_112] : memref<2x1x4x8x16xbf16, #tpu.memory_space<vmem>>, vector<1x1x1x8x16xbf16>
      %149 = vector.shape_cast %148 : vector<1x1x1x8x16xbf16> to vector<8x16xbf16>
      %cst_113 = arith.constant dense<0.000000e+00> : vector<8x8xf32>
      %150 = tpu.matmul %145, %147, %cst_113 {dimension_numbers = #tpu.dot_dimension_numbers<[1], [1], [0], [0], [0, 0, 1, 0], [], []>} : vector<8x16xbf16>, vector<8x16xbf16>, vector<8x8xf32> -> vector<8x8xf32>
      %cst_114 = arith.constant dense<0xFF800000> : vector<8xf32>
      %151 = vector.multi_reduction <maximumf>, %150, %cst_114 [1] : vector<8x8xf32> to vector<8xf32>
      %152 = vector.shape_cast %151 : vector<8xf32> to vector<8x1xf32>
      %153 = vector.broadcast %152 : vector<8x1xf32> to vector<8x8xf32>
      %154 = arith.subf %150, %153 : vector<8x8xf32>
      %155 = math.exp %154 : vector<8x8xf32>
      %cst_115 = arith.constant dense<0.000000e+00> : vector<8xf32>
      %156 = vector.multi_reduction <add>, %155, %cst_115 [1] : vector<8x8xf32> to vector<8xf32>
      %157 = vector.shape_cast %156 : vector<8xf32> to vector<8x1xf32>
      %158 = tpu.reciprocal %157 {approx = true} : vector<8x1xf32> -> vector<8x1xf32>
      %159 = vector.broadcast %158 : vector<8x1xf32> to vector<8x8xf32>
      %160 = arith.mulf %155, %159 : vector<8x8xf32>
      %161 = arith.truncf %160 : vector<8x8xf32> to vector<8x8xbf16>
      %cst_116 = arith.constant dense<0.000000e+00> : vector<8x16xf32>
      %162 = tpu.matmul %161, %149, %cst_116 {dimension_numbers = #tpu.dot_dimension_numbers<[1], [0], [0], [1], [0, 0, 1, 1], [], []>} : vector<8x8xbf16>, vector<8x16xbf16>, vector<8x16xf32> -> vector<8x16xf32>
      %163 = arith.truncf %162 : vector<8x16xf32> to vector<8x16xbf16>
      %c0_117 = arith.constant 0 : index
      %c32 = arith.constant 32 : index
      %164 = vector.load %arg19[%c0_117, %c32] : memref<8x64xbf16, #tpu.memory_space<vmem>>, vector<8x16xbf16>
      tpu.vector_store %arg19[%c0_117, %c32], %163 {strides = array<i32>} : memref<8x64xbf16, #tpu.memory_space<vmem>>, vector<8x16xbf16>,
      %165 = vector.extract_strided_slice %72 {offsets = [0, 48], sizes = [8, 16], strides = [1, 1]} : vector<8x192xbf16> to vector<8x16xbf16>
      %c0_118 = arith.constant 0 : index
      %c0_119 = arith.constant 0 : index
      %c3_120 = arith.constant 3 : index
      %c0_121 = arith.constant 0 : index
      %c0_122 = arith.constant 0 : index
      %166 = vector.load %arg16[%c0_118, %c0_119, %c3_120, %c0_121, %c0_122] : memref<2x1x4x8x16xbf16, #tpu.memory_space<vmem>>, vector<1x1x1x8x16xbf16>
      %167 = vector.shape_cast %166 : vector<1x1x1x8x16xbf16> to vector<8x16xbf16>
      %c1_123 = arith.constant 1 : index
      %c0_124 = arith.constant 0 : index
      %c3_125 = arith.constant 3 : index
      %c0_126 = arith.constant 0 : index
      %c0_127 = arith.constant 0 : index
      %168 = vector.load %arg16[%c1_123, %c0_124, %c3_125, %c0_126, %c0_127] : memref<2x1x4x8x16xbf16, #tpu.memory_space<vmem>>, vector<1x1x1x8x16xbf16>
      %169 = vector.shape_cast %168 : vector<1x1x1x8x16xbf16> to vector<8x16xbf16>
      %cst_128 = arith.constant dense<0.000000e+00> : vector<8x8xf32>
      %170 = tpu.matmul %165, %167, %cst_128 {dimension_numbers = #tpu.dot_dimension_numbers<[1], [1], [0], [0], [0, 0, 1, 0], [], []>} : vector<8x16xbf16>, vector<8x16xbf16>, vector<8x8xf32> -> vector<8x8xf32>
      %cst_129 = arith.constant dense<0xFF800000> : vector<8xf32>
      %171 = vector.multi_reduction <maximumf>, %170, %cst_129 [1] : vector<8x8xf32> to vector<8xf32>
      %172 = vector.shape_cast %171 : vector<8xf32> to vector<8x1xf32>
      %173 = vector.broadcast %172 : vector<8x1xf32> to vector<8x8xf32>
      %174 = arith.subf %170, %173 : vector<8x8xf32>
      %175 = math.exp %174 : vector<8x8xf32>
      %cst_130 = arith.constant dense<0.000000e+00> : vector<8xf32>
      %176 = vector.multi_reduction <add>, %175, %cst_130 [1] : vector<8x8xf32> to vector<8xf32>
      %177 = vector.shape_cast %176 : vector<8xf32> to vector<8x1xf32>
      %178 = tpu.reciprocal %177 {approx = true} : vector<8x1xf32> -> vector<8x1xf32>
      %179 = vector.broadcast %178 : vector<8x1xf32> to vector<8x8xf32>
      %180 = arith.mulf %175, %179 : vector<8x8xf32>
      %181 = arith.truncf %180 : vector<8x8xf32> to vector<8x8xbf16>
      %cst_131 = arith.constant dense<0.000000e+00> : vector<8x16xf32>
      %182 = tpu.matmul %181, %169, %cst_131 {dimension_numbers = #tpu.dot_dimension_numbers<[1], [0], [0], [1], [0, 0, 1, 1], [], []>} : vector<8x8xbf16>, vector<8x16xbf16>, vector<8x16xf32> -> vector<8x16xf32>
      %183 = arith.truncf %182 : vector<8x16xf32> to vector<8x16xbf16>
      %c0_132 = arith.constant 0 : index
      %c48 = arith.constant 48 : index
      %184 = vector.load %arg19[%c0_132, %c48] : memref<8x64xbf16, #tpu.memory_space<vmem>>, vector<8x16xbf16>
      tpu.vector_store %arg19[%c0_132, %c48], %183 {strides = array<i32>} : memref<8x64xbf16, #tpu.memory_space<vmem>>, vector<8x16xbf16>,
      %c0_133 = arith.constant 0 : index
      %c0_134 = arith.constant 0 : index
      %185 = vector.load %arg19[%c0_133, %c0_134] : memref<8x64xbf16, #tpu.memory_space<vmem>>, vector<8x64xbf16>
      %c0_135 = arith.constant 0 : index
      %c0_136 = arith.constant 0 : index
      %186 = vector.load %arg7[%c0_135, %c0_136] : memref<64x64xbf16, #tpu.memory_space<vmem>>, vector<64x64xbf16>
      %cst_137 = arith.constant dense<0.000000e+00> : vector<8x64xf32>
      %187 = tpu.matmul %185, %186, %cst_137 {dimension_numbers = #tpu.dot_dimension_numbers<[1], [0], [0], [1], [0, 0, 1, 1], [], []>} : vector<8x64xbf16>, vector<64x64xbf16>, vector<8x64xf32> -> vector<8x64xf32>
      %c0_138 = arith.constant 0 : index
      %c0_139 = arith.constant 0 : index
      %188 = vector.load %arg8[%c0_138, %c0_139] : memref<1x64xf32, #tpu.memory_space<vmem>>, vector<1x64xf32>
      %189 = vector.shape_cast %188 : vector<1x64xf32> to vector<64xf32>
      %190 = vector.shape_cast %189 : vector<64xf32> to vector<1x64xf32>
      %191 = vector.broadcast %190 : vector<1x64xf32> to vector<8x64xf32>
      %192 = arith.addf %187, %191 : vector<8x64xf32>
      %193 = arith.addf %35, %192 : vector<8x64xf32>
      %c0_140 = arith.constant 0 : index
      %c0_141 = arith.constant 0 : index
      %194 = vector.load %arg17[%c0_140, %c0_141] : memref<8x64xf32, #tpu.memory_space<vmem>>, vector<8x64xf32>
      tpu.vector_store %arg17[%c0_140, %c0_141], %193 {strides = array<i32>} : memref<8x64xf32, #tpu.memory_space<vmem>>, vector<8x64xf32>,
      %c0_142 = arith.constant 0 : index
      %c0_143 = arith.constant 0 : index
      %195 = vector.load %arg9[%c0_142, %c0_143] : memref<1x64xf32, #tpu.memory_space<vmem>>, vector<1x64xf32>
      %196 = vector.shape_cast %195 : vector<1x64xf32> to vector<64xf32>
      %c0_144 = arith.constant 0 : index
      %c0_145 = arith.constant 0 : index
      %197 = vector.load %arg10[%c0_144, %c0_145] : memref<1x64xf32, #tpu.memory_space<vmem>>, vector<1x64xf32>
      %198 = vector.shape_cast %197 : vector<1x64xf32> to vector<64xf32>
      %cst_146 = arith.constant dense<0.000000e+00> : vector<8xf32>
      %199 = vector.multi_reduction <add>, %193, %cst_146 [1] : vector<8x64xf32> to vector<8xf32>
      %200 = vector.shape_cast %199 : vector<8xf32> to vector<8x1xf32>
      %cst_147 = arith.constant 6.400000e+01 : f32
      %201 = vector.broadcast %cst_147 : f32 to vector<8x1xf32>
      %202 = arith.divf %200, %201 : vector<8x1xf32>
      %203 = vector.broadcast %202 : vector<8x1xf32> to vector<8x64xf32>
      %204 = arith.subf %193, %203 : vector<8x64xf32>
      %205 = arith.mulf %204, %204 : vector<8x64xf32>
      %cst_148 = arith.constant dense<0.000000e+00> : vector<8xf32>
      %206 = vector.multi_reduction <add>, %205, %cst_148 [1] : vector<8x64xf32> to vector<8xf32>
      %207 = vector.shape_cast %206 : vector<8xf32> to vector<8x1xf32>
      %cst_149 = arith.constant 6.400000e+01 : f32
      %208 = vector.broadcast %cst_149 : f32 to vector<8x1xf32>
      %209 = arith.divf %207, %208 : vector<8x1xf32>
      %210 = vector.broadcast %202 : vector<8x1xf32> to vector<8x64xf32>
      %211 = arith.subf %193, %210 : vector<8x64xf32>
      %cst_150 = arith.constant 9.99999974E-6 : f32
      %212 = vector.broadcast %cst_150 : f32 to vector<8x1xf32>
      %213 = arith.addf %209, %212 : vector<8x1xf32>
      %214 = math.rsqrt %213 : vector<8x1xf32>
      %215 = vector.broadcast %214 : vector<8x1xf32> to vector<8x64xf32>
      %216 = arith.mulf %211, %215 : vector<8x64xf32>
      %217 = vector.shape_cast %196 : vector<64xf32> to vector<1x64xf32>
      %218 = vector.broadcast %217 : vector<1x64xf32> to vector<8x64xf32>
      %219 = arith.mulf %216, %218 : vector<8x64xf32>
      %220 = vector.shape_cast %198 : vector<64xf32> to vector<1x64xf32>
      %221 = vector.broadcast %220 : vector<1x64xf32> to vector<8x64xf32>
      %222 = arith.addf %219, %221 : vector<8x64xf32>
      %c0_151 = arith.constant 0 : index
      %c0_152 = arith.constant 0 : index
      %223 = vector.load %arg18[%c0_151, %c0_152] : memref<8x64xf32, #tpu.memory_space<vmem>>, vector<8x64xf32>
      tpu.vector_store %arg18[%c0_151, %c0_152], %222 {strides = array<i32>} : memref<8x64xf32, #tpu.memory_space<vmem>>, vector<8x64xf32>,
    } else {
    }
    %c0 = arith.constant 0 : index
    %c0_1 = arith.constant 0 : index
    %3 = vector.load %arg18[%c0, %c0_1] : memref<8x64xf32, #tpu.memory_space<vmem>>, vector<8x64xf32>
    %4 = arith.truncf %3 : vector<8x64xf32> to vector<8x64xbf16>
    %c0_2 = arith.constant 0 : index
    %c0_3 = arith.constant 0 : index
    %5 = vector.load %arg11[%c0_2, %c0_3] : memref<64x128xbf16, #tpu.memory_space<vmem>>, vector<64x128xbf16>
    %cst = arith.constant dense<0.000000e+00> : vector<8x128xf32>
    %6 = tpu.matmul %4, %5, %cst {dimension_numbers = #tpu.dot_dimension_numbers<[1], [0], [0], [1], [0, 0, 1, 1], [], []>} : vector<8x64xbf16>, vector<64x128xbf16>, vector<8x128xf32> -> vector<8x128xf32>
    %c0_4 = arith.constant 0 : index
    %c0_5 = arith.constant 0 : index
    %7 = vector.load %arg12[%c0_4, %c0_5] : memref<1x128xf32, #tpu.memory_space<vmem>>, vector<1x128xf32>
    %8 = vector.shape_cast %7 : vector<1x128xf32> to vector<128xf32>
    %9 = vector.shape_cast %8 : vector<128xf32> to vector<1x128xf32>
    %10 = vector.broadcast %9 : vector<1x128xf32> to vector<8x128xf32>
    %11 = arith.addf %6, %10 : vector<8x128xf32>
    %cst_6 = arith.constant 5.000000e-01 : f32
    %12 = vector.broadcast %cst_6 : f32 to vector<8x128xf32>
    %13 = arith.mulf %12, %11 : vector<8x128xf32>
    %14 = arith.mulf %11, %11 : vector<8x128xf32>
    %15 = arith.mulf %14, %11 : vector<8x128xf32>
    %cst_7 = arith.constant 4.471500e-02 : f32
    %16 = vector.broadcast %cst_7 : f32 to vector<8x128xf32>
    %17 = arith.mulf %16, %15 : vector<8x128xf32>
    %18 = arith.addf %11, %17 : vector<8x128xf32>
    %cst_8 = arith.constant 0.797884583 : f32
    %19 = vector.broadcast %cst_8 : f32 to vector<8x128xf32>
    %20 = arith.mulf %19, %18 : vector<8x128xf32>
    %21 = math.tanh %20 : vector<8x128xf32>
    %cst_9 = arith.constant 1.000000e+00 : f32
    %22 = vector.broadcast %cst_9 : f32 to vector<8x128xf32>
    %23 = arith.addf %22, %21 : vector<8x128xf32>
    %24 = arith.mulf %13, %23 : vector<8x128xf32>
    %c0_10 = arith.constant 0 : index
    %c0_11 = arith.constant 0 : index
    %25 = vector.load %arg17[%c0_10, %c0_11] : memref<8x64xf32, #tpu.memory_space<vmem>>, vector<8x64xf32>
    %26 = arith.truncf %24 : vector<8x128xf32> to vector<8x128xbf16>
    %c0_12 = arith.constant 0 : index
    %c0_13 = arith.constant 0 : index
    %27 = vector.load %arg13[%c0_12, %c0_13] : memref<128x64xbf16, #tpu.memory_space<vmem>>, vector<128x64xbf16>
    %cst_14 = arith.constant dense<0.000000e+00> : vector<8x64xf32>
    %28 = tpu.matmul %26, %27, %cst_14 {dimension_numbers = #tpu.dot_dimension_numbers<[1], [0], [0], [1], [0, 0, 1, 1], [], []>} : vector<8x128xbf16>, vector<128x64xbf16>, vector<8x64xf32> -> vector<8x64xf32>
    %29 = arith.addf %25, %28 : vector<8x64xf32>
    %c0_15 = arith.constant 0 : index
    %c0_16 = arith.constant 0 : index
    %30 = vector.load %arg17[%c0_15, %c0_16] : memref<8x64xf32, #tpu.memory_space<vmem>>, vector<8x64xf32>
    tpu.vector_store %arg17[%c0_15, %c0_16], %29 {strides = array<i32>} : memref<8x64xf32, #tpu.memory_space<vmem>>, vector<8x64xf32>,
    %c1_i32 = arith.constant 1 : i32
    %31 = arith.cmpi eq, %arg1, %c1_i32 : i32
    %32 = arith.extui %31 : i1 to i32
    %c0_i32_17 = arith.constant 0 : i32
    %33 = arith.cmpi ne, %32, %c0_i32_17 : i32
    scf.if %33 {
      %c0_18 = arith.constant 0 : index
      %c0_19 = arith.constant 0 : index
      %34 = vector.load %arg17[%c0_18, %c0_19] : memref<8x64xf32, #tpu.memory_space<vmem>>, vector<8x64xf32>
      %c0_20 = arith.constant 0 : index
      %c0_21 = arith.constant 0 : index
      %35 = vector.load %arg14[%c0_20, %c0_21] : memref<1x64xf32, #tpu.memory_space<vmem>>, vector<1x64xf32>
      %36 = vector.shape_cast %35 : vector<1x64xf32> to vector<64xf32>
      %37 = vector.shape_cast %36 : vector<64xf32> to vector<1x64xf32>
      %38 = vector.broadcast %37 : vector<1x64xf32> to vector<8x64xf32>
      %39 = arith.addf %34, %38 : vector<8x64xf32>
      %c0_22 = arith.constant 0 : index
      %c0_23 = arith.constant 0 : index
      %c0_24 = arith.constant 0 : index
      %40 = vector.load %arg15[%c0_22, %c0_23, %c0_24] : memref<1x8x64xf32, #tpu.memory_space<vmem>>, vector<1x8x64xf32>
      %41 = vector.shape_cast %40 : vector<1x8x64xf32> to vector<8x64xf32>
      %42 = vector.shape_cast %39 : vector<8x64xf32> to vector<1x8x64xf32>
      tpu.vector_store %arg15[%c0_22, %c0_23, %c0_24], %42 {strides = array<i32>} : memref<1x8x64xf32, #tpu.memory_space<vmem>>, vector<1x8x64xf32>,
    } else {
    }
    return
  }
  func.func @transform_0(%arg0: i32, %arg1: i32) -> (i32, i32, i32) {
    %c0_i32 = arith.constant 0 : i32
    %c0_i32_0 = arith.constant 0 : i32
    %c0_i32_1 = arith.constant 0 : i32
    return %arg0, %c0_i32, %c0_i32_0 : i32, i32, i32
  }
  func.func @transform_1(%arg0: i32, %arg1: i32) -> (i32, i32) {
    %c0_i32 = arith.constant 0 : i32
    %c0_i32_0 = arith.constant 0 : i32
    %c0_i32_1 = arith.constant 0 : i32
    return %c0_i32, %c0_i32_0 : i32, i32
  }
  func.func @transform_2(%arg0: i32, %arg1: i32) -> (i32, i32) {
    %c0_i32 = arith.constant 0 : i32
    %c0_i32_0 = arith.constant 0 : i32
    %c0_i32_1 = arith.constant 0 : i32
    return %c0_i32, %c0_i32_0 : i32, i32
  }
  func.func @transform_3(%arg0: i32, %arg1: i32) -> (i32, i32) {
    %c0_i32 = arith.constant 0 : i32
    %c0_i32_0 = arith.constant 0 : i32
    %c0_i32_1 = arith.constant 0 : i32
    return %c0_i32, %c0_i32_0 : i32, i32
  }
  func.func @transform_4(%arg0: i32, %arg1: i32) -> (i32, i32) {
    %c0_i32 = arith.constant 0 : i32
    %c0_i32_0 = arith.constant 0 : i32
    %c0_i32_1 = arith.constant 0 : i32
    return %c0_i32, %c0_i32_0 : i32, i32
  }
  func.func @transform_5(%arg0: i32, %arg1: i32) -> (i32, i32) {
    %c0_i32 = arith.constant 0 : i32
    %c0_i32_0 = arith.constant 0 : i32
    %c0_i32_1 = arith.constant 0 : i32
    return %c0_i32, %c0_i32_0 : i32, i32
  }
  func.func @transform_6(%arg0: i32, %arg1: i32) -> (i32, i32) {
    %c0_i32 = arith.constant 0 : i32
    %c0_i32_0 = arith.constant 0 : i32
    %c0_i32_1 = arith.constant 0 : i32
    return %c0_i32, %c0_i32_0 : i32, i32
  }
  func.func @transform_7(%arg0: i32, %arg1: i32) -> (i32, i32) {
    %c0_i32 = arith.constant 0 : i32
    %c0_i32_0 = arith.constant 0 : i32
    %c0_i32_1 = arith.constant 0 : i32
    return %c0_i32, %c0_i32_0 : i32, i32
  }
  func.func @transform_8(%arg0: i32, %arg1: i32) -> (i32, i32) {
    %c0_i32 = arith.constant 0 : i32
    %c0_i32_0 = arith.constant 0 : i32
    %c0_i32_1 = arith.constant 0 : i32
    return %c0_i32, %c0_i32_0 : i32, i32
  }
  func.func @transform_9(%arg0: i32, %arg1: i32) -> (i32, i32) {
    %c0_i32 = arith.constant 0 : i32
    %c0_i32_0 = arith.constant 0 : i32
    return %c0_i32, %arg1 : i32, i32
  }
  func.func @transform_10(%arg0: i32, %arg1: i32) -> (i32, i32) {
    %c0_i32 = arith.constant 0 : i32
    %c0_i32_0 = arith.constant 0 : i32
    return %c0_i32, %arg1 : i32, i32
  }
  func.func @transform_11(%arg0: i32, %arg1: i32) -> (i32, i32) {
    %c0_i32 = arith.constant 0 : i32
    %c0_i32_0 = arith.constant 0 : i32
    return %arg1, %c0_i32 : i32, i32
  }
  func.func @transform_12(%arg0: i32, %arg1: i32) -> (i32, i32) {
    %c0_i32 = arith.constant 0 : i32
    %c0_i32_0 = arith.constant 0 : i32
    %c0_i32_1 = arith.constant 0 : i32
    return %c0_i32, %c0_i32_0 : i32, i32
  }
  func.func @transform_13(%arg0: i32, %arg1: i32) -> (i32, i32, i32) {
    %c0_i32 = arith.constant 0 : i32
    %c0_i32_0 = arith.constant 0 : i32
    %c0_i32_1 = arith.constant 0 : i32
    return %arg0, %c0_i32, %c0_i32_0 : i32, i32, i32
  }
  func.func @transform_14(%arg0: i32, %arg1: i32) -> (i32, i32, i32, i32, i32) {
    %c0_i32 = arith.constant 0 : i32
    %c0_i32_0 = arith.constant 0 : i32
    %c0_i32_1 = arith.constant 0 : i32
    %c0_i32_2 = arith.constant 0 : i32
    %c0_i32_3 = arith.constant 0 : i32
    return %c0_i32, %arg0, %c0_i32_0, %c0_i32_1, %c0_i32_2 : i32, i32, i32, i32, i32
  }
}

</mosaic_0001>

<llo_original>
// kernel: tpu_custom_call.1
$region0: #{tpu_custom_call.1}
  #allocation0 [shape = 'u32[]', space=smem, size = 0x4, offset = 0x4, fixed_abs, tag = 'smem constant byte address 0x4 - core index']
  #allocation1 [shape = 'u32[72,128]{1,0:T(1,128)}', space=vmem, size = 0x9000, scoped, tag = 'internal scratch']
  #allocation2 [shape = 'f32[8,64]{1,0:T(8,128)}', space=vmem, size = 0x1000, scoped, tag = 'scratch operand']
  #allocation3 [shape = 'f32[8,64]{1,0:T(8,128)}', space=vmem, size = 0x1000, scoped, tag = 'scratch operand']
  #allocation4 [shape = 'bf16[8,64]{1,0:T(8,128)(2,1)}', space=vmem, size = 0x800, scoped, tag = 'scratch operand']
  #allocation10 [shape = 's32[]', space=sflag, size = 0x4, offset = 0, fixed_abs, tag = 'sflag constant byte address 0x0 - dummy sync flag']
  %s0 = inlined_call_operand.vmem [shape: f32[2,8,64], index: 0, kind: input, shape index: {}]
  %s1 = inlined_call_operand.vmem [shape: f32[1,64], index: 1, kind: input, shape index: {}]
  %s2 = inlined_call_operand.vmem [shape: f32[1,64], index: 2, kind: input, shape index: {}]
  %s3 = inlined_call_operand.vmem [shape: bf16[64,192], index: 3, kind: input, shape index: {}]
  %s4 = inlined_call_operand.vmem [shape: f32[1,192], index: 4, kind: input, shape index: {}]
  %s5 = inlined_call_operand.vmem [shape: bf16[64,64], index: 5, kind: input, shape index: {}]
  %s6 = inlined_call_operand.vmem [shape: f32[1,64], index: 6, kind: input, shape index: {}]
  %s7 = inlined_call_operand.vmem [shape: f32[1,64], index: 7, kind: input, shape index: {}]
  %s8 = inlined_call_operand.vmem [shape: f32[1,64], index: 8, kind: input, shape index: {}]
  %s9 = inlined_call_operand.vmem [shape: bf16[64,256], index: 9, kind: input, shape index: {}]
  %s10 = inlined_call_operand.vmem [shape: f32[1,256], index: 10, kind: input, shape index: {}]
  %s11 = inlined_call_operand.vmem [shape: bf16[256,64], index: 11, kind: input, shape index: {}]
  %s12 = inlined_call_operand.vmem [shape: f32[1,64], index: 12, kind: input, shape index: {}]
  %s13 = inlined_call_operand.hbm [shape: f32[2,8,64], index: 13, kind: output, shape index: {0}]
  %s14 = inlined_call_operand.hbm [shape: bf16[2,2,4,8,16], index: 14, kind: output, shape index: {1}]
  %15 = xla_tuple %s13, %s14
  %s16 = sld [smem:[#allocation0]]
  $region142: #{tpu_custom_call.1} parent=0
    _
  %s18 = ssub.s32 1, %s16
  %s19 = scalar_select 0, %s18, %s16
  $region1: #{tpu_custom_call.1} parent=0
    #allocation5 [shape = 'u8[32768]{0}', space=vmem, size = 0x8000, scoped, tag = 'input window, operand 9']
    #allocation6 [shape = 'u8[8192]{0}', space=vmem, size = 0x2000, scoped, tag = 'output window, operand 0']
    #allocation7 [shape = 's32[2]{0}', space=sflag, size = 0x8, scoped, tag = 'scoped memory for tpu_custom_call.1']
    #allocation8 [shape = 'u8[32768]{0}', space=vmem, size = 0x8000, scoped, tag = 'output window, operand 1']
    #allocation9 [shape = 's32[2]{0}', space=sflag, size = 0x8, scoped, tag = 'scoped memory for tpu_custom_call.1']
    %20 = vsyncpa [#allocation7], 0
    %s21 = scalar_lea.sflag [#allocation7], 1
    %22 = vsyncpa %s21, 0
    %23 = vsyncpa [#allocation9], 0
    %s24 = scalar_lea.sflag [#allocation9], 1
    %25 = vsyncpa %s24, 0
    loop: start=0, step=1, limit=6
    $region2: #{tpu_custom_call.1} parent=1 // loop_pre_header
      _
    $region3: #{tpu_custom_call.1} parent=1 // loop_header
      %s27 = sphi 0, %s31
      %p28 = scmp.ge.s32.totalorder %s27, 6
      %s34 = sphi 0, %s46
      %s35 = sphi 0, %s42
      %s36 = sphi 0, %s34
      %s37 = sphi 0, %s35
      %s38 = sphi 0, %s36
      %s39 = sphi 0, %s37
      %s49 = sphi 0, %s51
      %s52 = sphi 0, %s49
      %s53 = sphi 0, %s52
      %s69 = sphi 0, %s53
      %s73 = sphi 0, %s73
      %s75 = sphi 0, %s73
      %s76 = sphi 0, %s75
      %s90 = sphi 0, %s76
      %s94 = sphi 0, %s94
      %s96 = sphi 0, %s94
      %s97 = sphi 0, %s96
      %s111 = sphi 0, %s97
      %s115 = sphi 0, %s115
      %s117 = sphi 0, %s115
      %s118 = sphi 0, %s117
      %s132 = sphi 0, %s118
      %s136 = sphi 0, %s136
      %s138 = sphi 0, %s136
      %s139 = sphi 0, %s138
      %s153 = sphi 0, %s139
      %s157 = sphi 0, %s157
      %s159 = sphi 0, %s157
      %s160 = sphi 0, %s159
      %s174 = sphi 0, %s160
      %s178 = sphi 0, %s178
      %s180 = sphi 0, %s178
      %s181 = sphi 0, %s180
      %s195 = sphi 0, %s181
      %s199 = sphi 0, %s199
      %s201 = sphi 0, %s199
      %s202 = sphi 0, %s201
      %s216 = sphi 0, %s202
      %s220 = sphi 0, %s220
      %s222 = sphi 0, %s220
      %s223 = sphi 0, %s222
      %s237 = sphi 0, %s223
      %s243 = sphi 0, %s245
      %s246 = sphi 0, %s243
      %s247 = sphi 0, %s246
      %s263 = sphi 0, %s247
      %s269 = sphi 0, %s271
      %s272 = sphi 0, %s269
      %s273 = sphi 0, %s272
      %s289 = sphi 0, %s273
      %s295 = sphi 0, %s297
      %s298 = sphi 0, %s295
      %s299 = sphi 0, %s298
      %s315 = sphi 0, %s299
      %s319 = sphi 0, %s319
      %s321 = sphi 0, %s319
      %s322 = sphi 0, %s321
      %s336 = sphi 0, %s322
      %s342 = sphi 0, %s344
      %s345 = sphi 0, %s342
      %s346 = sphi 0, %s345
      %s362 = sphi 0, %s346
      %s368 = sphi 0, %s370
      %s371 = sphi 0, %s368
      %s372 = sphi 0, %s371
      %s388 = sphi 0, %s372
    $region4: #{tpu_custom_call.1} parent=1 // loop_header_branch
      %30 = sbr.rel (%p28) target = $region8
    $region5: #{tpu_custom_call.1} parent=1 // loop_body
      %s32 = ssub.s32 %s27, 1
      %s33 = ssub.s32 %s27, 2
      %s40 = sadd.s32 1, %s35
      %p41 = scmp.ge.s32.totalorder %s40, 2
      %s42 = scalar_select %p41, 0, %s40
      %s43 = sadd.s32 1, %s34
      %s44 = scalar_select %p41, %s43, %s34
      %p45 = scmp.ge.s32.totalorder %s44, 2
      %s46 = scalar_select %p45, 0, %s44
      %s47 = ssub.s32 %s34, %s46
      %p48 = scmp.eq.s32.totalorder %s47, 0
      %s50 = sadd.s32 %s49, 1
      %s51 = scalar_select %p48, %s49, %s50
      %p54 = pneg %p48
      %p55 = scmp.eq.s32.totalorder %s27, 3
      %p56 = por %p54, %p55
      %p57 = scmp.ne.s32.totalorder %s49, %s52
      %p58 = scmp.eq.s32.totalorder %s27, 0
      %p59 = por %p57, %p58
      %p60 = scmp.ne.s32.totalorder %s49, %s52
      %p61 = scmp.eq.s32.totalorder %s32, 3
      %p62 = por %p60, %p61
      %p63 = scmp.ne.s32.totalorder %s52, %s53
      %p64 = scmp.eq.s32.totalorder %s32, 0
      %p65 = por %p63, %p64
      %p66 = scmp.ne.s32.totalorder %s52, %s53
      %p67 = scmp.eq.s32.totalorder %s33, 3
      %p68 = por %p66, %p67
      %p70 = scmp.ne.s32.totalorder %s53, %s69
      %p71 = scmp.eq.s32.totalorder %s33, 0
      %p72 = por %p70, %p71
      %s74 = sadd.s32 %s73, 1
      %p77 = scmp.eq.s32.totalorder %s27, 3
      %p78 = scmp.ne.s32.totalorder %s73, %s75
      %p79 = scmp.eq.s32.totalorder %s27, 0
      %p80 = por %p78, %p79
      %p81 = scmp.ne.s32.totalorder %s73, %s75
      %p82 = scmp.eq.s32.totalorder %s32, 3
      %p83 = por %p81, %p82
      %p84 = scmp.ne.s32.totalorder %s75, %s76
      %p85 = scmp.eq.s32.totalorder %s32, 0
      %p86 = por %p84, %p85
      %p87 = scmp.ne.s32.totalorder %s75, %s76
      %p88 = scmp.eq.s32.totalorder %s33, 3
      %p89 = por %p87, %p88
      %p91 = scmp.ne.s32.totalorder %s76, %s90
      %p92 = scmp.eq.s32.totalorder %s33, 0
      %p93 = por %p91, %p92
      %s95 = sadd.s32 %s94, 1
      %p98 = scmp.eq.s32.totalorder %s27, 3
      %p99 = scmp.ne.s32.totalorder %s94, %s96
      %p100 = scmp.eq.s32.totalorder %s27, 0
      %p101 = por %p99, %p100
      %p102 = scmp.ne.s32.totalorder %s94, %s96
      %p103 = scmp.eq.s32.totalorder %s32, 3
      %p104 = por %p102, %p103
      %p105 = scmp.ne.s32.totalorder %s96, %s97
      %p106 = scmp.eq.s32.totalorder %s32, 0
      %p107 = por %p105, %p106
      %p108 = scmp.ne.s32.totalorder %s96, %s97
      %p109 = scmp.eq.s32.totalorder %s33, 3
      %p110 = por %p108, %p109
      %p112 = scmp.ne.s32.totalorder %s97, %s111
      %p113 = scmp.eq.s32.totalorder %s33, 0
      %p114 = por %p112, %p113
      %s116 = sadd.s32 %s115, 1
      %p119 = scmp.eq.s32.totalorder %s27, 3
      %p120 = scmp.ne.s32.totalorder %s115, %s117
      %p121 = scmp.eq.s32.totalorder %s27, 0
      %p122 = por %p120, %p121
      %p123 = scmp.ne.s32.totalorder %s115, %s117
      %p124 = scmp.eq.s32.totalorder %s32, 3
      %p125 = por %p123, %p124
      %p126 = scmp.ne.s32.totalorder %s117, %s118
      %p127 = scmp.eq.s32.totalorder %s32, 0
      %p128 = por %p126, %p127
      %p129 = scmp.ne.s32.totalorder %s117, %s118
      %p130 = scmp.eq.s32.totalorder %s33, 3
      %p131 = por %p129, %p130
      %p133 = scmp.ne.s32.totalorder %s118, %s132
      %p134 = scmp.eq.s32.totalorder %s33, 0
      %p135 = por %p133, %p134
      %s137 = sadd.s32 %s136, 1
      %p140 = scmp.eq.s32.totalorder %s27, 3
      %p141 = scmp.ne.s32.totalorder %s136, %s138
      %p142 = scmp.eq.s32.totalorder %s27, 0
      %p143 = por %p141, %p142
      %p144 = scmp.ne.s32.totalorder %s136, %s138
      %p145 = scmp.eq.s32.totalorder %s32, 3
      %p146 = por %p144, %p145
      %p147 = scmp.ne.s32.totalorder %s138, %s139
      %p148 = scmp.eq.s32.totalorder %s32, 0
      %p149 = por %p147, %p148
      %p150 = scmp.ne.s32.totalorder %s138, %s139
      %p151 = scmp.eq.s32.totalorder %s33, 3
      %p152 = por %p150, %p151
      %p154 = scmp.ne.s32.totalorder %s139, %s153
      %p155 = scmp.eq.s32.totalorder %s33, 0
      %p156 = por %p154, %p155
      %s158 = sadd.s32 %s157, 1
      %p161 = scmp.eq.s32.totalorder %s27, 3
      %p162 = scmp.ne.s32.totalorder %s157, %s159
      %p163 = scmp.eq.s32.totalorder %s27, 0
      %p164 = por %p162, %p163
      %p165 = scmp.ne.s32.totalorder %s157, %s159
      %p166 = scmp.eq.s32.totalorder %s32, 3
      %p167 = por %p165, %p166
      %p168 = scmp.ne.s32.totalorder %s159, %s160
      %p169 = scmp.eq.s32.totalorder %s32, 0
      %p170 = por %p168, %p169
      %p171 = scmp.ne.s32.totalorder %s159, %s160
      %p172 = scmp.eq.s32.totalorder %s33, 3
      %p173 = por %p171, %p172
      %p175 = scmp.ne.s32.totalorder %s160, %s174
      %p176 = scmp.eq.s32.totalorder %s33, 0
      %p177 = por %p175, %p176
      %s179 = sadd.s32 %s178, 1
      %p182 = scmp.eq.s32.totalorder %s27, 3
      %p183 = scmp.ne.s32.totalorder %s178, %s180
      %p184 = scmp.eq.s32.totalorder %s27, 0
      %p185 = por %p183, %p184
      %p186 = scmp.ne.s32.totalorder %s178, %s180
      %p187 = scmp.eq.s32.totalorder %s32, 3
      %p188 = por %p186, %p187
      %p189 = scmp.ne.s32.totalorder %s180, %s181
      %p190 = scmp.eq.s32.totalorder %s32, 0
      %p191 = por %p189, %p190
      %p192 = scmp.ne.s32.totalorder %s180, %s181
      %p193 = scmp.eq.s32.totalorder %s33, 3
      %p194 = por %p192, %p193
      %p196 = scmp.ne.s32.totalorder %s181, %s195
      %p197 = scmp.eq.s32.totalorder %s33, 0
      %p198 = por %p196, %p197
      %s200 = sadd.s32 %s199, 1
      %p203 = scmp.eq.s32.totalorder %s27, 3
      %p204 = scmp.ne.s32.totalorder %s199, %s201
      %p205 = scmp.eq.s32.totalorder %s27, 0
      %p206 = por %p204, %p205
      %p207 = scmp.ne.s32.totalorder %s199, %s201
      %p208 = scmp.eq.s32.totalorder %s32, 3
      %p209 = por %p207, %p208
      %p210 = scmp.ne.s32.totalorder %s201, %s202
      %p211 = scmp.eq.s32.totalorder %s32, 0
      %p212 = por %p210, %p211
      %p213 = scmp.ne.s32.totalorder %s201, %s202
      %p214 = scmp.eq.s32.totalorder %s33, 3
      %p215 = por %p213, %p214
      %p217 = scmp.ne.s32.totalorder %s202, %s216
      %p218 = scmp.eq.s32.totalorder %s33, 0
      %p219 = por %p217, %p218
      %s221 = sadd.s32 %s220, 1
      %p224 = scmp.eq.s32.totalorder %s27, 3
      %p225 = scmp.ne.s32.totalorder %s220, %s222
      %p226 = scmp.eq.s32.totalorder %s27, 0
      %p227 = por %p225, %p226
      %p228 = scmp.ne.s32.totalorder %s220, %s222
      %p229 = scmp.eq.s32.totalorder %s32, 3
      %p230 = por %p228, %p229
      %p231 = scmp.ne.s32.totalorder %s222, %s223
      %p232 = scmp.eq.s32.totalorder %s32, 0
      %p233 = por %p231, %p232
      %p234 = scmp.ne.s32.totalorder %s222, %s223
      %p235 = scmp.eq.s32.totalorder %s33, 3
      %p236 = por %p234, %p235
      %p238 = scmp.ne.s32.totalorder %s223, %s237
      %p239 = scmp.eq.s32.totalorder %s33, 0
      %p240 = por %p238, %p239
      %s241 = ssub.s32 %s35, %s42
      %p242 = scmp.eq.s32.totalorder %s241, 0
      %s244 = sadd.s32 %s243, 1
      %s245 = scalar_select %p242, %s243, %s244
      %p248 = pneg %p242
      %p249 = scmp.eq.s32.totalorder %s27, 3
      %p250 = por %p248, %p249
      %p251 = scmp.ne.s32.totalorder %s243, %s246
      %p252 = scmp.eq.s32.totalorder %s27, 0
      %p253 = por %p251, %p252
      %p254 = scmp.ne.s32.totalorder %s243, %s246
      %p255 = scmp.eq.s32.totalorder %s32, 3
      %p256 = por %p254, %p255
      %p257 = scmp.ne.s32.totalorder %s246, %s247
      %p258 = scmp.eq.s32.totalorder %s32, 0
      %p259 = por %p257, %p258
      %p260 = scmp.ne.s32.totalorder %s246, %s247
      %p261 = scmp.eq.s32.totalorder %s33, 3
      %p262 = por %p260, %p261
      %p264 = scmp.ne.s32.totalorder %s247, %s263
      %p265 = scmp.eq.s32.totalorder %s33, 0
      %p266 = por %p264, %p265
      %s267 = ssub.s32 %s35, %s42
      %p268 = scmp.eq.s32.totalorder %s267, 0
      %s270 = sadd.s32 %s269, 1
      %s271 = scalar_select %p268, %s269, %s270
      %p274 = pneg %p268
      %p275 = scmp.eq.s32.totalorder %s27, 3
      %p276 = por %p274, %p275
      %p277 = scmp.ne.s32.totalorder %s269, %s272
      %p278 = scmp.eq.s32.totalorder %s27, 0
      %p279 = por %p277, %p278
      %p280 = scmp.ne.s32.totalorder %s269, %s272
      %p281 = scmp.eq.s32.totalorder %s32, 3
      %p282 = por %p280, %p281
      %p283 = scmp.ne.s32.totalorder %s272, %s273
      %p284 = scmp.eq.s32.totalorder %s32, 0
      %p285 = por %p283, %p284
      %p286 = scmp.ne.s32.totalorder %s272, %s273
      %p287 = scmp.eq.s32.totalorder %s33, 3
      %p288 = por %p286, %p287
      %p290 = scmp.ne.s32.totalorder %s273, %s289
      %p291 = scmp.eq.s32.totalorder %s33, 0
      %p292 = por %p290, %p291
      %s293 = ssub.s32 %s35, %s42
      %p294 = scmp.eq.s32.totalorder %s293, 0
      %s296 = sadd.s32 %s295, 1
      %s297 = scalar_select %p294, %s295, %s296
      %p300 = pneg %p294
      %p301 = scmp.eq.s32.totalorder %s27, 3
      %p302 = por %p300, %p301
      %p303 = scmp.ne.s32.totalorder %s295, %s298
      %p304 = scmp.eq.s32.totalorder %s27, 0
      %p305 = por %p303, %p304
      %p306 = scmp.ne.s32.totalorder %s295, %s298
      %p307 = scmp.eq.s32.totalorder %s32, 3
      %p308 = por %p306, %p307
      %p309 = scmp.ne.s32.totalorder %s298, %s299
      %p310 = scmp.eq.s32.totalorder %s32, 0
      %p311 = por %p309, %p310
      %p312 = scmp.ne.s32.totalorder %s298, %s299
      %p313 = scmp.eq.s32.totalorder %s33, 3
      %p314 = por %p312, %p313
      %p316 = scmp.ne.s32.totalorder %s299, %s315
      %p317 = scmp.eq.s32.totalorder %s33, 0
      %p318 = por %p316, %p317
      %s320 = sadd.s32 %s319, 1
      %p323 = scmp.eq.s32.totalorder %s27, 3
      %p324 = scmp.ne.s32.totalorder %s319, %s321
      %p325 = scmp.eq.s32.totalorder %s27, 0
      %p326 = por %p324, %p325
      %p327 = scmp.ne.s32.totalorder %s319, %s321
      %p328 = scmp.eq.s32.totalorder %s32, 3
      %p329 = por %p327, %p328
      %p330 = scmp.ne.s32.totalorder %s321, %s322
      %p331 = scmp.eq.s32.totalorder %s32, 0
      %p332 = por %p330, %p331
      %p333 = scmp.ne.s32.totalorder %s321, %s322
      %p334 = scmp.eq.s32.totalorder %s33, 3
      %p335 = por %p333, %p334
      %p337 = scmp.ne.s32.totalorder %s322, %s336
      %p338 = scmp.eq.s32.totalorder %s33, 0
      %p339 = por %p337, %p338
      %s340 = ssub.s32 %s34, %s46
      %p341 = scmp.eq.s32.totalorder %s340, 0
      %s343 = sadd.s32 %s342, 1
      %s344 = scalar_select %p341, %s342, %s343
      %p347 = pneg %p341
      %p348 = scmp.eq.s32.totalorder %s27, 3
      %p349 = por %p347, %p348
      %p350 = scmp.ne.s32.totalorder %s342, %s345
      %p351 = scmp.eq.s32.totalorder %s27, 0
      %p352 = por %p350, %p351
      %p353 = scmp.ne.s32.totalorder %s342, %s345
      %p354 = scmp.eq.s32.totalorder %s32, 3
      %p355 = por %p353, %p354
      %p356 = scmp.ne.s32.totalorder %s345, %s346
      %p357 = scmp.eq.s32.totalorder %s32, 0
      %p358 = por %p356, %p357
      %p359 = scmp.ne.s32.totalorder %s345, %s346
      %p360 = scmp.eq.s32.totalorder %s33, 3
      %p361 = por %p359, %p360
      %p363 = scmp.ne.s32.totalorder %s346, %s362
      %p364 = scmp.eq.s32.totalorder %s33, 0
      %p365 = por %p363, %p364
      %s366 = ssub.s32 %s34, %s46
      %p367 = scmp.eq.s32.totalorder %s366, 0
      %s369 = sadd.s32 %s368, 1
      %s370 = scalar_select %p367, %s368, %s369
      %p373 = pneg %p367
      %p374 = scmp.eq.s32.totalorder %s27, 3
      %p375 = por %p373, %p374
      %p376 = scmp.ne.s32.totalorder %s368, %s371
      %p377 = scmp.eq.s32.totalorder %s27, 0
      %p378 = por %p376, %p377
      %p379 = scmp.ne.s32.totalorder %s368, %s371
      %p380 = scmp.eq.s32.totalorder %s32, 3
      %p381 = por %p379, %p380
      %p382 = scmp.ne.s32.totalorder %s371, %s372
      %p383 = scmp.eq.s32.totalorder %s32, 0
      %p384 = por %p382, %p383
      %p385 = scmp.ne.s32.totalorder %s371, %s372
      %p386 = scmp.eq.s32.totalorder %s33, 3
      %p387 = por %p385, %p386
      %p389 = scmp.ne.s32.totalorder %s372, %s388
      %p390 = scmp.eq.s32.totalorder %s33, 0
      %p391 = por %p389, %p390
      %p392 = scmp.le.s32.totalorder 1, %s27
      %p393 = scmp.lt.s32.totalorder %s27, 5
      %p394 = pnand %p392, %p393
      %p395 = pneg %p394
      // Predicated region
      $region9: #{tpu_custom_call.1} parent=5 // pred_check
        _
      $region10: #{tpu_custom_call.1} parent=5 // pred_check_branch
        %397 = sbr.rel (%p394) target = $region12
      $region11: #{tpu_custom_call.1} parent=5 // pred_region
        %s398 = ssub.s32 %s27, 1
        // Predicated region
        $region13: #{tpu_custom_call.1} parent=11 // pred_check
          %p399 = pneg %p86
        $region14: #{tpu_custom_call.1} parent=11 // pred_check_branch
          %401 = sbr.rel (%p399) target = $region16
        $region15: #{tpu_custom_call.1} parent=11 // pred_region
          _
        $region16: #{tpu_custom_call.1} parent=11 // pred_fallthru
          _
        // Predicated region
        $region17: #{tpu_custom_call.1} parent=11 // pred_check
          %p402 = pneg %p107
        $region18: #{tpu_custom_call.1} parent=11 // pred_check_branch
          %404 = sbr.rel (%p402) target = $region20
        $region19: #{tpu_custom_call.1} parent=11 // pred_region
          _
        $region20: #{tpu_custom_call.1} parent=11 // pred_fallthru
          _
        // Predicated region
        $region21: #{tpu_custom_call.1} parent=11 // pred_check
          %p405 = pneg %p128
        $region22: #{tpu_custom_call.1} parent=11 // pred_check_branch
          %407 = sbr.rel (%p405) target = $region24
        $region23: #{tpu_custom_call.1} parent=11 // pred_region
          _
        $region24: #{tpu_custom_call.1} parent=11 // pred_fallthru
          _
        // Predicated region
        $region25: #{tpu_custom_call.1} parent=11 // pred_check
          %p408 = pneg %p149
        $region26: #{tpu_custom_call.1} parent=11 // pred_check_branch
          %410 = sbr.rel (%p408) target = $region28
        $region27: #{tpu_custom_call.1} parent=11 // pred_region
          _
        $region28: #{tpu_custom_call.1} parent=11 // pred_fallthru
          _
        // Predicated region
        $region29: #{tpu_custom_call.1} parent=11 // pred_check
          %p411 = pneg %p170
        $region30: #{tpu_custom_call.1} parent=11 // pred_check_branch
          %413 = sbr.rel (%p411) target = $region32
        $region31: #{tpu_custom_call.1} parent=11 // pred_region
          _
        $region32: #{tpu_custom_call.1} parent=11 // pred_fallthru
          _
        // Predicated region
        $region33: #{tpu_custom_call.1} parent=11 // pred_check
          %p414 = pneg %p191
        $region34: #{tpu_custom_call.1} parent=11 // pred_check_branch
          %416 = sbr.rel (%p414) target = $region36
        $region35: #{tpu_custom_call.1} parent=11 // pred_region
          _
        $region36: #{tpu_custom_call.1} parent=11 // pred_fallthru
          _
        // Predicated region
        $region37: #{tpu_custom_call.1} parent=11 // pred_check
          %p417 = pneg %p212
        $region38: #{tpu_custom_call.1} parent=11 // pred_check_branch
          %419 = sbr.rel (%p417) target = $region40
        $region39: #{tpu_custom_call.1} parent=11 // pred_region
          _
        $region40: #{tpu_custom_call.1} parent=11 // pred_fallthru
          _
        // Predicated region
        $region41: #{tpu_custom_call.1} parent=11 // pred_check
          %p420 = pneg %p233
        $region42: #{tpu_custom_call.1} parent=11 // pred_check_branch
          %422 = sbr.rel (%p420) target = $region44
        $region43: #{tpu_custom_call.1} parent=11 // pred_region
          _
        $region44: #{tpu_custom_call.1} parent=11 // pred_fallthru
          _
        // Predicated region
        $region45: #{tpu_custom_call.1} parent=11 // pred_check
          %p423 = pneg %p332
        $region46: #{tpu_custom_call.1} parent=11 // pred_check_branch
          %425 = sbr.rel (%p423) target = $region48
        $region47: #{tpu_custom_call.1} parent=11 // pred_region
          _
        $region48: #{tpu_custom_call.1} parent=11 // pred_fallthru
          _
      $region12: #{tpu_custom_call.1} parent=5 // pred_fallthru
        _
      %p426 = scmp.lt.s32.totalorder %s27, 4
      // Predicated region
      $region49: #{tpu_custom_call.1} parent=5 // pred_check
        %p427 = pneg %p426
      $region50: #{tpu_custom_call.1} parent=5 // pred_check_branch
        %429 = sbr.rel (%p427) target = $region52
      $region51: #{tpu_custom_call.1} parent=5 // pred_region
        // Predicated region
        $region53: #{tpu_custom_call.1} parent=51 // pred_check
          %p430 = pneg %p59
        $region54: #{tpu_custom_call.1} parent=51 // pred_check_branch
          %432 = sbr.rel (%p430) target = $region56
        $region55: #{tpu_custom_call.1} parent=51 // pred_region
          %p433 = scmp.lt.s32.totalorder %s34, 1
          %s434 = scalar_select %p433, %s34, 1
          %s435 = smul.addr %s434, 8
          %s436 = scalar_lea.vmem %s0, %s435
        $region56: #{tpu_custom_call.1} parent=51 // pred_fallthru
          _
        // Predicated region
        $region57: #{tpu_custom_call.1} parent=51 // pred_check
          %p437 = pneg %p253
        $region58: #{tpu_custom_call.1} parent=51 // pred_check_branch
          %439 = sbr.rel (%p437) target = $region60
        $region59: #{tpu_custom_call.1} parent=51 // pred_region
          %s440 = sand.u32 %s243, 1
          %s441 = sand.u32 %s243, 1
          %s442 = smul.addr %s441, 32
          %s443 = scalar_lea.vmem [#allocation5], %s442
          %s444 = smul.addr %s35, 4
          %s445 = scalar_lea.vmem %s9, %s444
          // Predicated region
          $region61: #{tpu_custom_call.1} parent=59 // pred_check
            _
          $region62: #{tpu_custom_call.1} parent=59 // pred_check_branch
            %447 = sbr.rel (0) target = $region64
          $region63: #{tpu_custom_call.1} parent=59 // pred_region
            // Predicated region
            $region65: #{tpu_custom_call.1} parent=63 // pred_check
              _
            $region66: #{tpu_custom_call.1} parent=63 // pred_check_branch
              %449 = sbr.rel target = $region68
            $region67: #{tpu_custom_call.1} parent=63 // pred_region
              // Predicated region
              $region80: #{tpu_custom_call.1} parent=67 // pred_check
                _
              $region81: #{tpu_custom_call.1} parent=67 // pred_check_branch
                %479 = sbr.rel (0) target = $region83
              $region82: #{tpu_custom_call.1} parent=67 // pred_region
                loop: start=0, step=1, limit=1
                $region84: #{tpu_custom_call.1} parent=82 // loop_pre_header
                  _
                $region85: #{tpu_custom_call.1} parent=82 // loop_header
                  %s481 = sphi 0, %s485
                  %p482 = scmp.ge.s32.totalorder %s481, 1
                  %s486 = sphi %s445, %s445
                  %s487 = sphi %s443, %s443
                $region86: #{tpu_custom_call.1} parent=82 // loop_header_branch
                  %484 = sbr.rel (%p482) target = $region90
                $region87: #{tpu_custom_call.1} parent=82 // loop_body
                  _
                $region88: #{tpu_custom_call.1} parent=82 // loop_footer
                  %s485 = sadd.s32 1, %s481
                $region89: #{tpu_custom_call.1} parent=82 // loop_footer_branch
                  %480 = sbr.rel target = $region85
                $region90: #{tpu_custom_call.1} parent=82 // loop_exit
                  _
                %s489 = ssub.s32 16, 1
                loop: start=0, step=1, limit=1
                $region91: #{tpu_custom_call.1} parent=82 // loop_pre_header
                  _
                $region92: #{tpu_custom_call.1} parent=82 // loop_header
                  %s491 = sphi 0, %s495
                  %p492 = scmp.ge.s32.totalorder %s491, 1
                  %s496 = sphi %s445, %s445
                  %s497 = sphi %s443, %s443
                $region93: #{tpu_custom_call.1} parent=82 // loop_header_branch
                  %494 = sbr.rel (%p492) target = $region97
                $region94: #{tpu_custom_call.1} parent=82 // loop_body
                  %v498 = vld [vmem:[%s496] sm:%s489]
                  %499 = vst [vmem:[%s497] sm:%s489] %v498
                  %v500 = vld [vmem:[%s496 + $0x8] sm:%s489]
                  %501 = vst [vmem:[%s497 + $0x4] sm:%s489] %v500
                  %v502 = vld [vmem:[%s496 + $0x10] sm:%s489]
                  %503 = vst [vmem:[%s497 + $0x8] sm:%s489] %v502
                  %v504 = vld [vmem:[%s496 + $0x18] sm:%s489]
                  %505 = vst [vmem:[%s497 + $0xc] sm:%s489] %v504
                  %v506 = vld [vmem:[%s496 + $0x20] sm:%s489]
                  %507 = vst [vmem:[%s497 + $0x10] sm:%s489] %v506
                  %v508 = vld [vmem:[%s496 + $0x28] sm:%s489]
                  %509 = vst [vmem:[%s497 + $0x14] sm:%s489] %v508
                  %v510 = vld [vmem:[%s496 + $0x30] sm:%s489]
                  %511 = vst [vmem:[%s497 + $0x18] sm:%s489] %v510
                  %v512 = vld [vmem:[%s496 + $0x38] sm:%s489]
                  %513 = vst [vmem:[%s497 + $0x1c] sm:%s489] %v512
                $region95: #{tpu_custom_call.1} parent=82 // loop_footer
                  %s495 = sadd.s32 1, %s491
                $region96: #{tpu_custom_call.1} parent=82 // loop_footer_branch
                  %490 = sbr.rel target = $region92
                $region97: #{tpu_custom_call.1} parent=82 // loop_exit
                  _
              $region83: #{tpu_custom_call.1} parent=67 // pred_fallthru
                _
            $region68: #{tpu_custom_call.1} parent=63 // pred_fallthru
              _
            // Predicated region
            $region69: #{tpu_custom_call.1} parent=63 // pred_check
              _
            $region70: #{tpu_custom_call.1} parent=63 // pred_check_branch
              %451 = sbr.rel (0) target = $region72
            $region71: #{tpu_custom_call.1} parent=63 // pred_region
              %s453 = ssub.s32 16, 1
              loop: start=0, step=1, limit=1
              $region73: #{tpu_custom_call.1} parent=71 // loop_pre_header
                _
              $region74: #{tpu_custom_call.1} parent=71 // loop_header
                %s455 = sphi 0, %s459
                %p456 = scmp.ge.s32.totalorder %s455, 1
                %s460 = sphi %s445, %s445
                %s461 = sphi %s443, %s443
              $region75: #{tpu_custom_call.1} parent=71 // loop_header_branch
                %458 = sbr.rel (%p456) target = $region79
              $region76: #{tpu_custom_call.1} parent=71 // loop_body
                %v462 = vld [vmem:[%s460] sm:%s453]
                %463 = vst [vmem:[%s461] sm:%s453] %v462
                %v464 = vld [vmem:[%s460 + $0x8] sm:%s453]
                %465 = vst [vmem:[%s461 + $0x4] sm:%s453] %v464
                %v466 = vld [vmem:[%s460 + $0x10] sm:%s453]
                %467 = vst [vmem:[%s461 + $0x8] sm:%s453] %v466
                %v468 = vld [vmem:[%s460 + $0x18] sm:%s453]
                %469 = vst [vmem:[%s461 + $0xc] sm:%s453] %v468
                %v470 = vld [vmem:[%s460 + $0x20] sm:%s453]
                %471 = vst [vmem:[%s461 + $0x10] sm:%s453] %v470
                %v472 = vld [vmem:[%s460 + $0x28] sm:%s453]
                %473 = vst [vmem:[%s461 + $0x14] sm:%s453] %v472
                %v474 = vld [vmem:[%s460 + $0x30] sm:%s453]
                %475 = vst [vmem:[%s461 + $0x18] sm:%s453] %v474
                %v476 = vld [vmem:[%s460 + $0x38] sm:%s453]
                %477 = vst [vmem:[%s461 + $0x1c] sm:%s453] %v476
              $region77: #{tpu_custom_call.1} parent=71 // loop_footer
                %s459 = sadd.s32 1, %s455
              $region78: #{tpu_custom_call.1} parent=71 // loop_footer_branch
                %454 = sbr.rel target = $region74
              $region79: #{tpu_custom_call.1} parent=71 // loop_exit
                _
            $region72: #{tpu_custom_call.1} parent=63 // pred_fallthru
              _
          $region64: #{tpu_custom_call.1} parent=59 // pred_fallthru
            _
          %514 = vnop
        $region60: #{tpu_custom_call.1} parent=51 // pred_fallthru
          _
        // Predicated region
        $region98: #{tpu_custom_call.1} parent=51 // pred_check
          %p515 = pneg %p279
        $region99: #{tpu_custom_call.1} parent=51 // pred_check_branch
          %517 = sbr.rel (%p515) target = $region101
        $region100: #{tpu_custom_call.1} parent=51 // pred_region
          %p518 = scmp.lt.s32.totalorder %s35, 1
          %s519 = scalar_select %p518, %s35, 1
          %s520 = scalar_lea.vmem %s10, %s519
        $region101: #{tpu_custom_call.1} parent=51 // pred_fallthru
          _
        // Predicated region
        $region102: #{tpu_custom_call.1} parent=51 // pred_check
          %p521 = pneg %p305
        $region103: #{tpu_custom_call.1} parent=51 // pred_check_branch
          %523 = sbr.rel (%p521) target = $region105
        $region104: #{tpu_custom_call.1} parent=51 // pred_region
          %s524 = smul.u32 16, %s35
          %p525 = scmp.lt.s32.totalorder %s524, 31
          %s526 = scalar_select %p525, %s524, 31
          %s527 = smul.addr %s526, 4
          %s528 = scalar_lea.vmem %s11, %s527
          %s529 = smul.u32 16, %s35
        $region105: #{tpu_custom_call.1} parent=51 // pred_fallthru
          _
      $region52: #{tpu_custom_call.1} parent=5 // pred_fallthru
        _
      %p530 = scmp.le.s32.totalorder 1, %s27
      %p531 = scmp.lt.s32.totalorder %s27, 5
      %p532 = pnand %p530, %p531
      %p533 = pneg %p532
      // Predicated region
      $region106: #{tpu_custom_call.1} parent=5 // pred_check
        _
      $region107: #{tpu_custom_call.1} parent=5 // pred_check_branch
        %535 = sbr.rel (%p532) target = $region109
      $region108: #{tpu_custom_call.1} parent=5 // pred_region
        %s536 = ssub.s32 %s27, 1
        %s537 = sand.u32 %s246, 1
        %s538 = sand.u32 %s246, 1
        %s539 = smul.addr %s538, 32
        %s540 = scalar_lea.vmem [#allocation5], %s539
        // Predicated region
        $region110: #{tpu_custom_call.1} parent=108 // pred_check
          %p541 = pneg %p259
        $region111: #{tpu_custom_call.1} parent=108 // pred_check_branch
          %543 = sbr.rel (%p541) target = $region113
        $region112: #{tpu_custom_call.1} parent=108 // pred_region
          _
        $region113: #{tpu_custom_call.1} parent=108 // pred_fallthru
          _
        %p544 = scmp.lt.s32.totalorder %s36, 1
        %s545 = scalar_select %p544, %s36, 1
        %s546 = smul.addr %s545, 8
        %s547 = scalar_lea.vmem %s0, %s546
        %p548 = pneg %p65
        %p549 = pneg %p62
        %p550 = pneg %p86
        %p551 = pneg %p83
        %p552 = pneg %p107
        %p553 = pneg %p104
        %p554 = pneg %p128
        %p555 = pneg %p125
        %p556 = pneg %p149
        %p557 = pneg %p146
        %p558 = pneg %p170
        %p559 = pneg %p167
        %p560 = pneg %p191
        %p561 = pneg %p188
        %p562 = pneg %p212
        %p563 = pneg %p209
        %p564 = pneg %p233
        %p565 = pneg %p230
        %s566 = sand.u32 %s246, 1
        %s567 = sand.u32 %s246, 1
        %s568 = smul.addr %s567, 32
        %s569 = scalar_lea.vmem [#allocation5], %s568
        %p570 = pneg %p259
        %p571 = pneg %p256
        %p572 = scmp.lt.s32.totalorder %s37, 1
        %s573 = scalar_select %p572, %s37, 1
        %s574 = scalar_lea.vmem %s10, %s573
        %p575 = pneg %p285
        %p576 = pneg %p282
        %s577 = smul.u32 16, %s37
        %p578 = scmp.lt.s32.totalorder %s577, 31
        %s579 = scalar_select %p578, %s577, 31
        %s580 = smul.addr %s579, 4
        %s581 = scalar_lea.vmem %s11, %s580
        %p582 = pneg %p311
        %p583 = pneg %p308
        %p584 = pneg %p332
        %p585 = pneg %p329
        %p586 = pneg %p358
        %p587 = pneg %p355
        %s588 = sand.u32 %s345, 1
        %s589 = scalar_lea.sflag [#allocation7], %s588
        %s590 = sand.u32 %s345, 1
        %s591 = smul.addr %s590, 8
        %s592 = scalar_lea.vmem [#allocation6], %s591
        %p593 = pneg %p384
        %p594 = pneg %p381
        %s595 = sand.u32 %s371, 1
        %s596 = scalar_lea.sflag [#allocation9], %s595
        %s597 = sand.u32 %s371, 1
        %s598 = smul.addr %s597, 32
        %s599 = scalar_lea.vmem [#allocation8], %s598
        %p600 = scmp.lt.s32.totalorder %s36, 1
        %s601 = scalar_select %p600, %s36, 1
        %s602 = smul.addr %s601, 8
        %s603 = scalar_lea.vmem %s0, %s602
        %p604 = scmp.lt.s32.totalorder %s37, 1
        %s605 = scalar_select %p604, %s37, 1
        %s606 = scalar_lea.vmem %s10, %s605
        %s607 = smul.u32 16, %s37
        %p608 = scmp.lt.s32.totalorder %s607, 31
        %s609 = scalar_select %p608, %s607, 31
        %s610 = smul.addr %s609, 4
        %s611 = scalar_lea.vmem %s11, %s610
        %s612 = smul.u32 16, %s37
        %p614 = scmp.eq.s32.totalorder %s37, 0
        // Predicated region
        $region114: #{tpu_custom_call.1} parent=108 // pred_check
          %p615 = pneg %p614
        $region115: #{tpu_custom_call.1} parent=108 // pred_check_branch
          %617 = sbr.rel (%p615) target = $region117
        $region116: #{tpu_custom_call.1} parent=108 // pred_region
          %v618 = vld [vmem:[%s603] sm:$0xff]
          %v619 = vld [vmem:[%s1] sm:$0x1]
          %v620 = vld [vmem:[%s2] sm:$0x1]
          %vm621 = vcmask 523264
          %v622 = vsel %vm621, %v618, 0.0
          %623 = vadd.xlane.f32.xlu0 %v622
          %v624 = vpop.xlane.xlu0 %623
          %v625 = vrcp.pop 64.0
          %v626 = vmul.f32 64.0, %v625
          %v627 = vsub.f32 1.0, %v626
          %v628 = vmul.f32 %v625, %v627
          %v629 = vadd.f32 %v625, %v628
          %vm630 = vweird.f32 %v625
          %v631 = vsel %vm630, %v625, %v629
          %v632 = vmul.f32 %v624, %v631
          %v633 = vsub.f32 %v618, %v632
          %v634 = vmul.f32 %v633, %v633
          %v635 = vsel %vm621, %v634, 0.0
          %636 = vadd.xlane.f32.xlu0 %v635
          %v637 = vpop.xlane.xlu0 %636
          %v638 = vmul.f32 %v637, %v631
          %v639 = vadd.f32 %v638, 1e-05
          %v640 = vrsqrt.pop %v639
          %v641 = vmul.f32 %v640, %v639
          %v642 = vmul.f32 %v641, %v640
          %v643 = vmul.f32 0.5, %v642
          %v644 = vsub.f32 1.5, %v643
          %v645 = vmul.f32 %v640, %v644
          %vm646 = vweird.f32 %v639
          %vm647 = vweird.f32 %v640
          %vm648 = vmor %vm646, %vm647
          %v649 = vsel %vm648, %v640, %v645
          %v650 = vmul.f32 %v633, %v649
          %v652 = vperm.slane %v619, 0
          %v654 = vmul.f32 %v650, %v652
          %v656 = vperm.slane %v620, 0
          %v658 = vadd.f32 %v654, %v656
          %v659 = vpack.c.bf16 %v658, %v658
          %v660 = vld [vmem:[%s3] sm:$0xff]
          %v661 = vld [vmem:[%s3 + $0x8] sm:$0xff]
          %v662 = vld [vmem:[%s3 + $0x10] sm:$0xff]
          %v663 = vld [vmem:[%s3 + $0x18] sm:$0xff]
          %v664 = vld [vmem:[%s3 + $0x20] sm:$0xff]
          %v665 = vld [vmem:[%s3 + $0x28] sm:$0xff]
          %v666 = vld [vmem:[%s3 + $0x30] sm:$0xff]
          %v667 = vld [vmem:[%s3 + $0x38] sm:$0xff]
          %v668 = vld [vmem:[%s4] sm:$0x3]
          %v670 = vperm.slane %v668, 0
          %v671 = vperm.slane %v668, 1
          %v682 = vunpack.c.l.b16 %v660
          %v683 = vunpack.c.h.b16 %v660
          %v684 = vunpack.c.l.b16 %v661
          %v685 = vunpack.c.h.b16 %v661
          %v686 = vunpack.c.l.b16 %v662
          %v687 = vunpack.c.h.b16 %v662
          %v688 = vunpack.c.l.b16 %v663
          %v689 = vunpack.c.h.b16 %v663
          %v690 = vunpack.c.l.b16 %v664
          %v691 = vunpack.c.h.b16 %v664
          %v692 = vunpack.c.l.b16 %v665
          %v693 = vunpack.c.h.b16 %v665
          %v694 = vunpack.c.l.b16 %v666
          %v695 = vunpack.c.h.b16 %v666
          %v696 = vunpack.c.l.b16 %v667
          %v697 = vunpack.c.h.b16 %v667
          %v698 = vpack.c.b16 %v684, %v682
          %v699 = vpack.c.b16 %v685, %v683
          %v700 = vpack.c.b16 %v688, %v686
          %v701 = vpack.c.b16 %v689, %v687
          %v702 = vpack.c.b16 %v692, %v690
          %v703 = vpack.c.b16 %v693, %v691
          %v704 = vpack.c.b16 %v696, %v694
          %v705 = vpack.c.b16 %v697, %v695
          %v715 = vsel %vm621, %v659, 0
          %717 = vmatpush.bf16.msra.mxu0 0
          %718 = vmatpush.bf16.msra.mxu0 0
          %719 = vmatpush.bf16.msra.mxu0 0
          %720 = vmatpush.bf16.msra.mxu0 0
          %721 = vmatpush.bf16.msra.mxu0 %v704
          %722 = vmatpush.bf16.msra.mxu0 %v702
          %723 = vmatpush.bf16.msra.mxu0 %v700
          %724 = vmatpush.bf16.msra.mxu0 %v698
          %725 = vmatmul.bf16.gmra.mxu0 %v715
          %v726 = vpop.f32.mrf.mxu0
          %v727 = vadd.f32 %v670, %v726
          %v728 = vpop.f32.mrf.mxu0
          %729 = vdwg.mxu0
          %730 = vmatpush.bf16.msra.mxu0 0
          %731 = vmatpush.bf16.msra.mxu0 0
          %732 = vmatpush.bf16.msra.mxu0 0
          %733 = vmatpush.bf16.msra.mxu0 0
          %734 = vmatpush.bf16.msra.mxu0 %v705
          %735 = vmatpush.bf16.msra.mxu0 %v703
          %736 = vmatpush.bf16.msra.mxu0 %v701
          %737 = vmatpush.bf16.msra.mxu0 %v699
          %738 = vmatmul.bf16.gmra.mxu0 %v715
          %v739 = vpop.f32.mrf.mxu0
          %v740 = vadd.f32 %v671, %v739
          %v741 = vpop.f32.mrf.mxu0
          %742 = vdwg.mxu0
          %v743 = vpack.c.bf16 %v740, %v727
          %745 = vrot.lane.b32.xlu0 %v743, 64
          %v746 = vpop.permute.xlu0 %745
          %vm748 = vcmask 125952
          %749 = vst.msk [vmem:[%s599] sm:$0xf] %vm748, %v746
          %v750 = vrot.slane %v743, 4
          %s752 = scalar_lea.vmem %s599, 16 [#allocation8]
          %753 = vst.msk [vmem:[%s752] sm:$0xf] %vm748, %v750
          %754 = vrot.lane.b32.xlu0 %v743, 48
          %v755 = vpop.permute.xlu0 %754
          %s757 = scalar_lea.vmem %s599, 4 [#allocation8]
          %758 = vst.msk [vmem:[%s757] sm:$0xf] %vm748, %v755
          %759 = vrot.lane.b32.xlu0 %v743, 112
          %v760 = vpop.permute.xlu0 %759
          %v761 = vrot.slane %v760, 4
          %s763 = scalar_lea.vmem %s599, 20 [#allocation8]
          %764 = vst.msk [vmem:[%s763] sm:$0xf] %vm748, %v761
          %765 = vrot.lane.b32.xlu0 %v743, 32
          %v766 = vpop.permute.xlu0 %765
          %s768 = scalar_lea.vmem %s599, 8 [#allocation8]
          %769 = vst.msk [vmem:[%s768] sm:$0xf] %vm748, %v766
          %770 = vrot.lane.b32.xlu0 %v743, 96
          %v771 = vpop.permute.xlu0 %770
          %v772 = vrot.slane %v771, 4
          %s774 = scalar_lea.vmem %s599, 24 [#allocation8]
          %775 = vst.msk [vmem:[%s774] sm:$0xf] %vm748, %v772
          %776 = vrot.lane.b32.xlu0 %v743, 16
          %v777 = vpop.permute.xlu0 %776
          %s779 = scalar_lea.vmem %s599, 12 [#allocation8]
          %780 = vst.msk [vmem:[%s779] sm:$0xf] %vm748, %v777
          %781 = vrot.lane.b32.xlu0 %v743, 80
          %v782 = vpop.permute.xlu0 %781
          %v783 = vrot.slane %v782, 4
          %s785 = scalar_lea.vmem %s599, 28 [#allocation8]
          %786 = vst.msk [vmem:[%s785] sm:$0xf] %vm748, %v783
          %v787 = vld [vmem:[%s599] sm:$0xf]
          %v788 = vld [vmem:[%s752] sm:$0xf]
          %vm789 = vcmask 130048
          %v791 = vsel %vm789, %v743, 0
          %v794 = vsel %vm789, %v787, 0
          %796 = vmatpush.bf16.xpose.msra.mxu0 0
          %797 = vmatpush.bf16.xpose.msra.mxu0 0
          %798 = vmatpush.bf16.xpose.msra.mxu0 0
          %799 = vmatpush.bf16.xpose.msra.mxu0 0
          %800 = vmatpush.bf16.xpose.msra.mxu0 0
          %801 = vmatpush.bf16.xpose.msra.mxu0 0
          %802 = vmatpush.bf16.xpose.msra.mxu0 0
          %803 = vmatpush.bf16.xpose.msra.mxu0 %v794
          %804 = vmatmul.bf16.gmra.mxu0 %v791
          %v805 = vpop.f32.mrf.mxu0
          %v806 = vadd.f32 0.0, %v805
          %v807 = vpop.f32.mrf.mxu0
          %808 = vdwg.mxu0
          %vm809 = vcmask 64512
          %v810 = vsel %vm809, %v806, -inf
          %811 = vmax.xlane.f32.xlu0 %v810
          %v812 = vpop.xlane.xlu0 %811
          %v813 = vsub.f32 %v806, %v812
          %v814 = vmul.f32 %v813, 1.442695
          %v815 = vpow.pop %v814
          %v816 = vsel %vm809, %v815, 0.0
          %817 = vadd.xlane.f32.xlu0 %v816
          %v818 = vpop.xlane.xlu0 %817
          %v819 = vrcp.pop %v818
          %v820 = vmul.f32 %v815, %v819
          %v821 = vpack.c.bf16 %v820, %v820
          %v823 = vsel %vm809, %v821, 0
          %vm825 = vcmask 1043456
          %v827 = vsel %vm825, %v788, 0
          %829 = vmatpush.bf16.msra.mxu0 0
          %830 = vmatpush.bf16.msra.mxu0 0
          %831 = vmatpush.bf16.msra.mxu0 0
          %832 = vmatpush.bf16.msra.mxu0 0
          %833 = vmatpush.bf16.msra.mxu0 0
          %834 = vmatpush.bf16.msra.mxu0 0
          %835 = vmatpush.bf16.msra.mxu0 0
          %836 = vmatpush.bf16.msra.mxu0 %v827
          %837 = vmatmul.bf16.gmra.mxu0 %v823
          %v838 = vpop.f32.mrf.mxu0
          %v839 = vadd.f32 0.0, %v838
          %v840 = vpop.f32.mrf.mxu0
          %841 = vdwg.mxu0
          %v842 = vpack.c.bf16 %v839, %v839
          %843 = vst.msk [vmem:[#allocation4] sm:$0xf] %vm748, %v842
          %v844 = vld [vmem:[%s757] sm:$0xf]
          %v845 = vld [vmem:[%s763] sm:$0xf]
          %v846 = vunpack.c.l.b16 %v743
          %v847 = vpack.c.b16 %v846, %v846
          %848 = vrot.lane.b32.xlu0 %v847, 112
          %v849 = vpop.permute.xlu0 %848
          %v851 = vsel %vm789, %v849, 0
          %v854 = vsel %vm789, %v844, 0
          %856 = vmatpush.bf16.xpose.msra.mxu0 0
          %857 = vmatpush.bf16.xpose.msra.mxu0 0
          %858 = vmatpush.bf16.xpose.msra.mxu0 0
          %859 = vmatpush.bf16.xpose.msra.mxu0 0
          %860 = vmatpush.bf16.xpose.msra.mxu0 0
          %861 = vmatpush.bf16.xpose.msra.mxu0 0
          %862 = vmatpush.bf16.xpose.msra.mxu0 0
          %863 = vmatpush.bf16.xpose.msra.mxu0 %v854
          %864 = vmatmul.bf16.gmra.mxu0 %v851
          %v865 = vpop.f32.mrf.mxu0
          %v866 = vadd.f32 0.0, %v865
          %v867 = vpop.f32.mrf.mxu0
          %868 = vdwg.mxu0
          %v869 = vsel %vm809, %v866, -inf
          %870 = vmax.xlane.f32.xlu0 %v869
          %v871 = vpop.xlane.xlu0 %870
          %v872 = vsub.f32 %v866, %v871
          %v873 = vmul.f32 %v872, 1.442695
          %v874 = vpow.pop %v873
          %v875 = vsel %vm809, %v874, 0.0
          %876 = vadd.xlane.f32.xlu0 %v875
          %v877 = vpop.xlane.xlu0 %876
          %v878 = vrcp.pop %v877
          %v879 = vmul.f32 %v874, %v878
          %v880 = vpack.c.bf16 %v879, %v879
          %v882 = vsel %vm809, %v880, 0
          %v885 = vsel %vm825, %v845, 0
          %887 = vmatpush.bf16.msra.mxu0 0
          %888 = vmatpush.bf16.msra.mxu0 0
          %889 = vmatpush.bf16.msra.mxu0 0
          %890 = vmatpush.bf16.msra.mxu0 0
          %891 = vmatpush.bf16.msra.mxu0 0
          %892 = vmatpush.bf16.msra.mxu0 0
          %893 = vmatpush.bf16.msra.mxu0 0
          %894 = vmatpush.bf16.msra.mxu0 %v885
          %895 = vmatmul.bf16.gmra.mxu0 %v882
          %v896 = vpop.f32.mrf.mxu0
          %v897 = vadd.f32 0.0, %v896
          %v898 = vpop.f32.mrf.mxu0
          %899 = vdwg.mxu0
          %v900 = vpack.c.bf16 %v897, %v897
          %902 = vrot.lane.b32.xlu0 %v900, 16
          %v903 = vpop.permute.xlu0 %902
          %vm905 = vcmask 257152
          %906 = vst.msk [vmem:[#allocation4] sm:$0xf] %vm905, %v903
          %v907 = vld [vmem:[%s768] sm:$0xf]
          %v908 = vld [vmem:[%s774] sm:$0xf]
          %909 = vrot.lane.b32.xlu0 %v847, 96
          %v910 = vpop.permute.xlu0 %909
          %v912 = vsel %vm789, %v910, 0
          %v915 = vsel %vm789, %v907, 0
          %917 = vmatpush.bf16.xpose.msra.mxu0 0
          %918 = vmatpush.bf16.xpose.msra.mxu0 0
          %919 = vmatpush.bf16.xpose.msra.mxu0 0
          %920 = vmatpush.bf16.xpose.msra.mxu0 0
          %921 = vmatpush.bf16.xpose.msra.mxu0 0
          %922 = vmatpush.bf16.xpose.msra.mxu0 0
          %923 = vmatpush.bf16.xpose.msra.mxu0 0
          %924 = vmatpush.bf16.xpose.msra.mxu0 %v915
          %925 = vmatmul.bf16.gmra.mxu0 %v912
          %v926 = vpop.f32.mrf.mxu0
          %v927 = vadd.f32 0.0, %v926
          %v928 = vpop.f32.mrf.mxu0
          %929 = vdwg.mxu0
          %v930 = vsel %vm809, %v927, -inf
          %931 = vmax.xlane.f32.xlu0 %v930
          %v932 = vpop.xlane.xlu0 %931
          %v933 = vsub.f32 %v927, %v932
          %v934 = vmul.f32 %v933, 1.442695
          %v935 = vpow.pop %v934
          %v936 = vsel %vm809, %v935, 0.0
          %937 = vadd.xlane.f32.xlu0 %v936
          %v938 = vpop.xlane.xlu0 %937
          %v939 = vrcp.pop %v938
          %v940 = vmul.f32 %v935, %v939
          %v941 = vpack.c.bf16 %v940, %v940
          %v943 = vsel %vm809, %v941, 0
          %v946 = vsel %vm825, %v908, 0
          %948 = vmatpush.bf16.msra.mxu0 0
          %949 = vmatpush.bf16.msra.mxu0 0
          %950 = vmatpush.bf16.msra.mxu0 0
          %951 = vmatpush.bf16.msra.mxu0 0
          %952 = vmatpush.bf16.msra.mxu0 0
          %953 = vmatpush.bf16.msra.mxu0 0
          %954 = vmatpush.bf16.msra.mxu0 0
          %955 = vmatpush.bf16.msra.mxu0 %v946
          %956 = vmatmul.bf16.gmra.mxu0 %v943
          %v957 = vpop.f32.mrf.mxu0
          %v958 = vadd.f32 0.0, %v957
          %v959 = vpop.f32.mrf.mxu0
          %960 = vdwg.mxu0
          %v961 = vpack.c.bf16 %v958, %v958
          %963 = vrot.lane.b32.xlu0 %v961, 32
          %v964 = vpop.permute.xlu0 %963
          %vm966 = vcmask 388352
          %967 = vst.msk [vmem:[#allocation4] sm:$0xf] %vm966, %v964
          %v968 = vld [vmem:[%s779] sm:$0xf]
          %v969 = vld [vmem:[%s785] sm:$0xf]
          %970 = vrot.lane.b32.xlu0 %v847, 80
          %v971 = vpop.permute.xlu0 %970
          %v973 = vsel %vm789, %v971, 0
          %v976 = vsel %vm789, %v968, 0
          %978 = vmatpush.bf16.xpose.msra.mxu0 0
          %979 = vmatpush.bf16.xpose.msra.mxu0 0
          %980 = vmatpush.bf16.xpose.msra.mxu0 0
          %981 = vmatpush.bf16.xpose.msra.mxu0 0
          %982 = vmatpush.bf16.xpose.msra.mxu0 0
          %983 = vmatpush.bf16.xpose.msra.mxu0 0
          %984 = vmatpush.bf16.xpose.msra.mxu0 0
          %985 = vmatpush.bf16.xpose.msra.mxu0 %v976
          %986 = vmatmul.bf16.gmra.mxu0 %v973
          %v987 = vpop.f32.mrf.mxu0
          %v988 = vadd.f32 0.0, %v987
          %v989 = vpop.f32.mrf.mxu0
          %990 = vdwg.mxu0
          %v991 = vsel %vm809, %v988, -inf
          %992 = vmax.xlane.f32.xlu0 %v991
          %v993 = vpop.xlane.xlu0 %992
          %v994 = vsub.f32 %v988, %v993
          %v995 = vmul.f32 %v994, 1.442695
          %v996 = vpow.pop %v995
          %v997 = vsel %vm809, %v996, 0.0
          %998 = vadd.xlane.f32.xlu0 %v997
          %v999 = vpop.xlane.xlu0 %998
          %v1000 = vrcp.pop %v999
          %v1001 = vmul.f32 %v996, %v1000
          %v1002 = vpack.c.bf16 %v1001, %v1001
          %v1004 = vsel %vm809, %v1002, 0
          %v1007 = vsel %vm825, %v969, 0
          %1009 = vmatpush.bf16.msra.mxu0 0
          %1010 = vmatpush.bf16.msra.mxu0 0
          %1011 = vmatpush.bf16.msra.mxu0 0
          %1012 = vmatpush.bf16.msra.mxu0 0
          %1013 = vmatpush.bf16.msra.mxu0 0
          %1014 = vmatpush.bf16.msra.mxu0 0
          %1015 = vmatpush.bf16.msra.mxu0 0
          %1016 = vmatpush.bf16.msra.mxu0 %v1007
          %1017 = vmatmul.bf16.gmra.mxu0 %v1004
          %v1018 = vpop.f32.mrf.mxu0
          %v1019 = vadd.f32 0.0, %v1018
          %v1020 = vpop.f32.mrf.mxu0
          %1021 = vdwg.mxu0
          %v1022 = vpack.c.bf16 %v1019, %v1019
          %1024 = vrot.lane.b32.xlu0 %v1022, 48
          %v1025 = vpop.permute.xlu0 %1024
          %vm1027 = vcmask 519552
          %1028 = vst.msk [vmem:[#allocation4] sm:$0xf] %vm1027, %v1025
          %v1029 = vld [vmem:[#allocation4] sm:$0xf]
          %v1030 = vld [vmem:[%s5] sm:$0xf]
          %v1031 = vld [vmem:[%s5 + $0x4] sm:$0xf]
          %v1032 = vld [vmem:[%s5 + $0x8] sm:$0xf]
          %v1033 = vld [vmem:[%s5 + $0xc] sm:$0xf]
          %v1034 = vld [vmem:[%s5 + $0x10] sm:$0xf]
          %v1035 = vld [vmem:[%s5 + $0x14] sm:$0xf]
          %v1036 = vld [vmem:[%s5 + $0x18] sm:$0xf]
          %v1037 = vld [vmem:[%s5 + $0x1c] sm:$0xf]
          %v1038 = vld [vmem:[%s6] sm:$0x1]
          %v1040 = vperm.slane %v1038, 0
          %v1050 = vunpack.c.l.b16 %v1030
          %v1051 = vunpack.c.l.b16 %v1031
          %v1052 = vunpack.c.l.b16 %v1032
          %v1053 = vunpack.c.l.b16 %v1033
          %v1054 = vunpack.c.l.b16 %v1034
          %v1055 = vunpack.c.l.b16 %v1035
          %v1056 = vunpack.c.l.b16 %v1036
          %v1057 = vunpack.c.l.b16 %v1037
          %v1058 = vpack.c.b16 %v1051, %v1050
          %v1059 = vpack.c.b16 %v1053, %v1052
          %v1060 = vpack.c.b16 %v1055, %v1054
          %v1061 = vpack.c.b16 %v1057, %v1056
          %v1067 = vsel %vm621, %v1029, 0
          %1069 = vmatpush.bf16.msra.mxu0 0
          %1070 = vmatpush.bf16.msra.mxu0 0
          %1071 = vmatpush.bf16.msra.mxu0 0
          %1072 = vmatpush.bf16.msra.mxu0 0
          %1073 = vmatpush.bf16.msra.mxu0 %v1061
          %1074 = vmatpush.bf16.msra.mxu0 %v1060
          %1075 = vmatpush.bf16.msra.mxu0 %v1059
          %1076 = vmatpush.bf16.msra.mxu0 %v1058
          %1077 = vmatmul.bf16.gmra.mxu0 %v1067
          %v1078 = vpop.f32.mrf.mxu0
          %v1079 = vadd.f32 %v1040, %v1078
          %v1080 = vpop.f32.mrf.mxu0
          %1081 = vdwg.mxu0
          %v1082 = vadd.f32 %v618, %v1079
          %1083 = vst.msk [vmem:[#allocation2] sm:$0xff] %vm621, %v1082
          %v1084 = vld [vmem:[%s7] sm:$0x1]
          %v1085 = vld [vmem:[%s8] sm:$0x1]
          %v1086 = vsel %vm621, %v1082, 0.0
          %1087 = vadd.xlane.f32.xlu0 %v1086
          %v1088 = vpop.xlane.xlu0 %1087
          %v1089 = vmul.f32 %v1088, %v631
          %v1090 = vsub.f32 %v1082, %v1089
          %v1091 = vmul.f32 %v1090, %v1090
          %v1092 = vsel %vm621, %v1091, 0.0
          %1093 = vadd.xlane.f32.xlu0 %v1092
          %v1094 = vpop.xlane.xlu0 %1093
          %v1095 = vmul.f32 %v1094, %v631
          %v1096 = vadd.f32 %v1095, 1e-05
          %v1097 = vrsqrt.pop %v1096
          %v1098 = vmul.f32 %v1097, %v1096
          %v1099 = vmul.f32 %v1098, %v1097
          %v1100 = vmul.f32 0.5, %v1099
          %v1101 = vsub.f32 1.5, %v1100
          %v1102 = vmul.f32 %v1097, %v1101
          %vm1103 = vweird.f32 %v1096
          %vm1104 = vweird.f32 %v1097
          %vm1105 = vmor %vm1103, %vm1104
          %v1106 = vsel %vm1105, %v1097, %v1102
          %v1107 = vmul.f32 %v1090, %v1106
          %v1109 = vperm.slane %v1084, 0
          %v1111 = vmul.f32 %v1107, %v1109
          %v1113 = vperm.slane %v1085, 0
          %v1115 = vadd.f32 %v1111, %v1113
          %1116 = vst.msk [vmem:[#allocation3] sm:$0xff] %vm621, %v1115
        $region117: #{tpu_custom_call.1} parent=108 // pred_fallthru
          _
        %v1117 = vld [vmem:[#allocation3] sm:$0xff]
        %v1118 = vpack.c.bf16 %v1117, %v1117
        %v1119 = vld [vmem:[%s540] sm:$0xf]
        %v1120 = vld [vmem:[%s540 + $0x4] sm:$0xf]
        %v1121 = vld [vmem:[%s540 + $0x8] sm:$0xf]
        %v1122 = vld [vmem:[%s540 + $0xc] sm:$0xf]
        %v1123 = vld [vmem:[%s540 + $0x10] sm:$0xf]
        %v1124 = vld [vmem:[%s540 + $0x14] sm:$0xf]
        %v1125 = vld [vmem:[%s540 + $0x18] sm:$0xf]
        %v1126 = vld [vmem:[%s540 + $0x1c] sm:$0xf]
        %v1127 = vld [vmem:[%s606] sm:$0x1]
        %v1129 = vperm.slane %v1127, 0
        %v1139 = vunpack.c.l.b16 %v1119
        %v1140 = vunpack.c.l.b16 %v1120
        %v1141 = vunpack.c.l.b16 %v1121
        %v1142 = vunpack.c.l.b16 %v1122
        %v1143 = vunpack.c.l.b16 %v1123
        %v1144 = vunpack.c.l.b16 %v1124
        %v1145 = vunpack.c.l.b16 %v1125
        %v1146 = vunpack.c.l.b16 %v1126
        %v1147 = vpack.c.b16 %v1140, %v1139
        %v1148 = vpack.c.b16 %v1142, %v1141
        %v1149 = vpack.c.b16 %v1144, %v1143
        %v1150 = vpack.c.b16 %v1146, %v1145
        %vm1155 = vcmask 523264
        %v1157 = vsel %vm1155, %v1118, 0
        %1159 = vmatpush.bf16.msra.mxu0 0
        %1160 = vmatpush.bf16.msra.mxu0 0
        %1161 = vmatpush.bf16.msra.mxu0 0
        %1162 = vmatpush.bf16.msra.mxu0 0
        %1163 = vmatpush.bf16.msra.mxu0 %v1150
        %1164 = vmatpush.bf16.msra.mxu0 %v1149
        %1165 = vmatpush.bf16.msra.mxu0 %v1148
        %1166 = vmatpush.bf16.msra.mxu0 %v1147
        %1167 = vmatmul.bf16.gmra.mxu0 %v1157
        %v1168 = vpop.f32.mrf.mxu0
        %v1169 = vadd.f32 %v1129, %v1168
        %v1170 = vpop.f32.mrf.mxu0
        %1171 = vdwg.mxu0
        %v1172 = vmul.f32 %v1169, 0.5
        %v1173 = vmul.f32 %v1169, %v1169
        %v1174 = vmul.f32 %v1173, %v1169
        %v1175 = vmul.f32 %v1174, 0.044715
        %v1176 = vadd.f32 %v1169, %v1175
        %v1177 = vmul.f32 %v1176, 0.7978846
        %v1178 = vtanh.pop %v1177
        %v1179 = vadd.f32 %v1178, 1.0
        %v1180 = vmul.f32 %v1172, %v1179
        %v1181 = vld [vmem:[#allocation2] sm:$0xff]
        %v1182 = vpack.c.bf16 %v1180, %v1180
        %v1183 = vld [vmem:[%s611] sm:$0xf]
        %v1184 = vld [vmem:[%s611 + $0x4] sm:$0xf]
        %v1185 = vld [vmem:[%s611 + $0x8] sm:$0xf]
        %v1186 = vld [vmem:[%s611 + $0xc] sm:$0xf]
        %v1187 = vld [vmem:[%s611 + $0x10] sm:$0xf]
        %v1188 = vld [vmem:[%s611 + $0x14] sm:$0xf]
        %v1189 = vld [vmem:[%s611 + $0x18] sm:$0xf]
        %v1190 = vld [vmem:[%s611 + $0x1c] sm:$0xf]
        %v1191 = vld [vmem:[%s611 + $0x20] sm:$0xf]
        %v1192 = vld [vmem:[%s611 + $0x24] sm:$0xf]
        %v1193 = vld [vmem:[%s611 + $0x28] sm:$0xf]
        %v1194 = vld [vmem:[%s611 + $0x2c] sm:$0xf]
        %v1195 = vld [vmem:[%s611 + $0x30] sm:$0xf]
        %v1196 = vld [vmem:[%s611 + $0x34] sm:$0xf]
        %v1197 = vld [vmem:[%s611 + $0x38] sm:$0xf]
        %v1198 = vld [vmem:[%s611 + $0x3c] sm:$0xf]
        %v1215 = vunpack.c.l.b16 %v1183
        %v1216 = vunpack.c.l.b16 %v1184
        %v1217 = vunpack.c.l.b16 %v1185
        %v1218 = vunpack.c.l.b16 %v1186
        %v1219 = vunpack.c.l.b16 %v1187
        %v1220 = vunpack.c.l.b16 %v1188
        %v1221 = vunpack.c.l.b16 %v1189
        %v1222 = vunpack.c.l.b16 %v1190
        %v1223 = vunpack.c.l.b16 %v1191
        %v1224 = vunpack.c.l.b16 %v1192
        %v1225 = vunpack.c.l.b16 %v1193
        %v1226 = vunpack.c.l.b16 %v1194
        %v1227 = vunpack.c.l.b16 %v1195
        %v1228 = vunpack.c.l.b16 %v1196
        %v1229 = vunpack.c.l.b16 %v1197
        %v1230 = vunpack.c.l.b16 %v1198
        %v1231 = vpack.c.b16 %v1216, %v1215
        %v1232 = vpack.c.b16 %v1218, %v1217
        %v1233 = vpack.c.b16 %v1220, %v1219
        %v1234 = vpack.c.b16 %v1222, %v1221
        %v1235 = vpack.c.b16 %v1224, %v1223
        %v1236 = vpack.c.b16 %v1226, %v1225
        %v1237 = vpack.c.b16 %v1228, %v1227
        %v1238 = vpack.c.b16 %v1230, %v1229
        %1247 = vmatpush.bf16.msra.mxu0 %v1238
        %1248 = vmatpush.bf16.msra.mxu0 %v1237
        %1249 = vmatpush.bf16.msra.mxu0 %v1236
        %1250 = vmatpush.bf16.msra.mxu0 %v1235
        %1251 = vmatpush.bf16.msra.mxu0 %v1234
        %1252 = vmatpush.bf16.msra.mxu0 %v1233
        %1253 = vmatpush.bf16.msra.mxu0 %v1232
        %1254 = vmatpush.bf16.msra.mxu0 %v1231
        %1255 = vmatmul.bf16.gmra.mxu0 %v1182
        %v1256 = vpop.f32.mrf.mxu0
        %v1257 = vadd.f32 0.0, %v1256
        %v1258 = vpop.f32.mrf.mxu0
        %1259 = vdwg.mxu0
        %v1260 = vadd.f32 %v1181, %v1257
        %1261 = vst.msk [vmem:[#allocation2] sm:$0xff] %vm1155, %v1260
        %p1262 = scmp.eq.s32.totalorder %s37, 1
        // Predicated region
        $region118: #{tpu_custom_call.1} parent=108 // pred_check
          %p1263 = pneg %p1262
        $region119: #{tpu_custom_call.1} parent=108 // pred_check_branch
          %1265 = sbr.rel (%p1263) target = $region121
        $region120: #{tpu_custom_call.1} parent=108 // pred_region
          %v1266 = vld [vmem:[#allocation2] sm:$0xff]
          %v1267 = vld [vmem:[%s12] sm:$0x1]
          %v1269 = vperm.slane %v1267, 0
          %v1271 = vadd.f32 %v1266, %v1269
          %1272 = vst.msk [vmem:[%s592] sm:$0xff] %vm1155, %v1271
        $region121: #{tpu_custom_call.1} parent=108 // pred_fallthru
          _
        %s1273 = sand.u32 %s345, 1
        %s1274 = scalar_lea.sflag [#allocation7], %s1273
        %s1275 = sand.u32 %s345, 1
        %s1276 = smul.addr %s1275, 8
        %s1277 = scalar_lea.vmem [#allocation6], %s1276
        %s1278 = sand.u32 %s371, 1
        %s1279 = scalar_lea.sflag [#allocation9], %s1278
        %s1280 = sand.u32 %s371, 1
        %s1281 = smul.addr %s1280, 32
        %s1282 = scalar_lea.vmem [#allocation8], %s1281
        // Predicated region
        $region122: #{tpu_custom_call.1} parent=108 // pred_check
          %p1283 = pneg %p355
        $region123: #{tpu_custom_call.1} parent=108 // pred_check_branch
          %1285 = sbr.rel (%p1283) target = $region125
        $region124: #{tpu_custom_call.1} parent=108 // pred_region
          %1287 = vsyncadd %s1274, 0
          %s1288 = smul.addr %s36, 8
          %s1289 = scalar_lea.hbm %s13, %s1288
          %s1291 = sshll.u32 %s1277, 4
          %s1292 = int_to_ptr.vmem [resolvable:$true] %s1291
          %s1293 = sshll.u32 %s1289, 4
          %s1294 = int_to_ptr.hbm [resolvable:$true] %s1293
          %1296 = dma.vmem_to_hbm [thread:$0]  %s1292, 128, %s1294, %s1274
        $region125: #{tpu_custom_call.1} parent=108 // pred_fallthru
          _
        // Predicated region
        $region126: #{tpu_custom_call.1} parent=108 // pred_check
          %p1297 = pneg %p381
        $region127: #{tpu_custom_call.1} parent=108 // pred_check_branch
          %1299 = sbr.rel (%p1297) target = $region129
        $region128: #{tpu_custom_call.1} parent=108 // pred_region
          #allocation11 [shape = 'u32[6]{0}', space=smem, size = 0x18, scoped, tag = 'DMA stride descriptor']
          %1301 = vsyncadd %s1279, 0
          %s1302 = smul.addr %s36, 4
          %s1303 = smul.addr %s1302, 4
          %s1304 = scalar_lea.hbm %s14, %s1303
          %s1306 = sshll.u32 1, 14
          %s1307 = sxor.u32 4294967295, %s1306
          %s1310 = sshll.u32 7, 18
          %s1311 = sxor.u32 4294967295, %s1310
          %s1312 = sand.u32 0, %s1311
          %s1314 = sor.u32 %s1312, 0
          %s1315 = sshll.u32 %s1282, 4
          %s1316 = int_to_ptr.vmem [resolvable:$true] %s1315
          %s1317 = sshll.u32 %s1304, 4
          %s1318 = int_to_ptr.hbm [resolvable:$true] %s1317
          %1324 = sst [smem:[#allocation11]] 256
          %s1325 = scalar_lea.smem [#allocation11], 1
          %1326 = sst [smem:[%s1325]] 512
          %s1327 = scalar_lea.smem [#allocation11], 2
          %1328 = sst [smem:[%s1327]] 4
          %s1329 = scalar_lea.smem [#allocation11], 3
          %1330 = sst [smem:[%s1329]] 64
          %s1331 = scalar_lea.smem [#allocation11], 4
          %1332 = sst [smem:[%s1331]] 64
          %s1333 = scalar_lea.smem [#allocation11], 5
          %1334 = sst [smem:[%s1333]] 4
          %1336 = dma.general %s1316, 512, %s1318, %s1279, [#allocation10], [#allocation11], %s1314, 0
        $region129: #{tpu_custom_call.1} parent=108 // pred_fallthru
          _
      $region109: #{tpu_custom_call.1} parent=5 // pred_fallthru
        _
      %p1337 = scmp.le.s32.totalorder 2, %s27
      // Predicated region
      $region130: #{tpu_custom_call.1} parent=5 // pred_check
        %p1338 = pneg %p1337
      $region131: #{tpu_custom_call.1} parent=5 // pred_check_branch
        %1340 = sbr.rel (%p1338) target = $region133
      $region132: #{tpu_custom_call.1} parent=5 // pred_region
        %s1341 = ssub.s32 %s27, 2
        // Predicated region
        $region134: #{tpu_custom_call.1} parent=132 // pred_check
          %p1342 = pneg %p361
        $region135: #{tpu_custom_call.1} parent=132 // pred_check_branch
          %1344 = sbr.rel (%p1342) target = $region137
        $region136: #{tpu_custom_call.1} parent=132 // pred_region
          %s1345 = sand.u32 %s346, 1
          %s1346 = scalar_lea.sflag [#allocation7], %s1345
          %s1347 = sand.u32 %s346, 1
          %s1348 = smul.addr %s1347, 8
          %s1349 = scalar_lea.vmem [#allocation6], %s1348
          %1351 = dma.done %s1346, 128
        $region137: #{tpu_custom_call.1} parent=132 // pred_fallthru
          _
        // Predicated region
        $region138: #{tpu_custom_call.1} parent=132 // pred_check
          %p1352 = pneg %p387
        $region139: #{tpu_custom_call.1} parent=132 // pred_check_branch
          %1354 = sbr.rel (%p1352) target = $region141
        $region140: #{tpu_custom_call.1} parent=132 // pred_region
          %s1355 = sand.u32 %s372, 1
          %s1356 = scalar_lea.sflag [#allocation9], %s1355
          %s1357 = sand.u32 %s372, 1
          %s1358 = smul.addr %s1357, 32
          %s1359 = scalar_lea.vmem [#allocation8], %s1358
          %1361 = dma.done %s1356, 512
        $region141: #{tpu_custom_call.1} parent=132 // pred_fallthru
          _
      $region133: #{tpu_custom_call.1} parent=5 // pred_fallthru
        _
    $region6: #{tpu_custom_call.1} parent=1 // loop_footer
      %s31 = sadd.s32 1, %s27
    $region7: #{tpu_custom_call.1} parent=1 // loop_footer_branch
      %26 = sbr.rel target = $region3
    $region8: #{tpu_custom_call.1} parent=1 // loop_exit
      _
    %1362 = vsyncpa [#allocation7], 1
    %s1363 = scalar_lea.sflag [#allocation7], 1
    %1364 = vsyncpa %s1363, 1
    %1365 = vsyncpa [#allocation9], 1
    %s1366 = scalar_lea.sflag [#allocation9], 1
    %1367 = vsyncpa %s1366, 1

</llo_original>
